<compile_context>
chip_gen: v7x
topology: tpu7x:2x2x1
jax: 0.10.0
libtpu: 0.0.40
codegen_flags: <defaults>
</compile_context>

<pallas_src>
import functools

import jax
import jax.numpy as jnp
import numpy as np
from jax import lax
from jax.experimental import pallas as pl
from jax.experimental.pallas import tpu as pltpu


# Same dimension-number convention as the pallas splash-attention kernels.
NT_DIMS = (((1,), (1,)), ((), ()))   # contract last dims   -> A @ B^T on the MXU
TN_DIMS = (((0,), (0,)), ((), ()))   # contract first dims  -> A^T @ B on the MXU


def attention_head_kernel(x_ref, wqkv_ref, add_ref, kmask_ref, vmask_ref, smask_ref,
                          w1_ref, b1_ref, w2_ref, b2_ref, o_ref,
                          *, B, N, head, qk_dim):
    x = x_ref[...]                                    # (B*N, C) f32
    xb = x.astype(jnp.bfloat16)

    # Fused Q|K|V projection (1x1 convs == channel matmuls).  The additive term already
    # contains biases + PE (and the K branch is pre-scaled by 1/sqrt(dqk) in the wrapper).
    qkv = jnp.dot(xb, wqkv_ref[...], preferred_element_type=jnp.float32) + add_ref[...]
    q = qkv[:, :qk_dim]                               # (B*N, qk_dim), PE added
    k = qkv[:, qk_dim:2 * qk_dim]                     # (B*N, qk_dim), PE added, pre-scaled
    v = qkv[:, 2 * qk_dim:]                           # (B*N, C)

    # Row-expand keys / values so every (batch, head) group owns a block of N rows, then
    # mask so each group keeps only its own head's dqk features / dv value columns.
    k_exp = jnp.concatenate(
        [k[b * N:(b + 1) * N] for b in range(B) for _ in range(head)], axis=0)
    v_exp = jnp.concatenate(
        [v[b * N:(b + 1) * N] for b in range(B) for _ in range(head)], axis=0)
    k_hat = (k_exp * kmask_ref[...]).astype(jnp.bfloat16)     # (G*N, qk_dim)
    v_hat = (v_exp * vmask_ref[...]).astype(jnp.bfloat16)     # (G*N, C)

    # Packed scores for all (batch, head) groups in one lane-dense matmul:
    #   s[g*N + i, b*N + j] = <k_{b,h}[i], q_{b,h}[j]> / sqrt(dqk),  g = b*head + h.
    s = lax.dot_general(k_hat, q.astype(jnp.bfloat16), NT_DIMS,
                        preferred_element_type=jnp.float32)   # (G*N keys, B*N queries)
    s = s + smask_ref[...]            # -1e30 where the key's batch != the query's batch

    # torch Softmax(dim=2) normalizes over the QUERY axis == the LANE axis of s.
    m = jnp.max(s, axis=-1, keepdims=True)
    e = jnp.exp(s - m)                                # masked entries underflow to exactly 0
    p = e * pl.reciprocal(jnp.sum(e, axis=-1, keepdims=True), approx=True)

    # attn[q, d] = sum_k p[k, q] * v_hat[k, d]: the block-diagonal V makes the head-concat
    # (B*N, C) layout fall out directly -- no scratch, no per-head stores, no concatenate.
    attn = lax.dot_general(p.astype(jnp.bfloat16), v_hat, TN_DIMS,
                           preferred_element_type=jnp.float32)   # (B*N, C)

    # MLP: Conv1x1 -> Mish -> Conv1x1, then residual (residual kept in f32).
    h1 = jnp.dot(attn.astype(jnp.bfloat16), w1_ref[...],
                 preferred_element_type=jnp.float32) + b1_ref[...]
    # Mish(x) = x * tanh(softplus(x));  tanh(softplus(x)) = t(t+2) / (t(t+2) + 2), t = e^x,
    # with the same >20 threshold as torch's softplus (avoids overflow, 1 exp + 1 recip).
    t = jnp.exp(jnp.minimum(h1, 20.0))
    num = t * (t + 2.0)
    tsp = jnp.where(h1 > 20.0, 1.0, num * pl.reciprocal(num + 2.0, approx=True))
    mish = h1 * tsp
    h2 = jnp.dot(mish.astype(jnp.bfloat16), w2_ref[...],
                 preferred_element_type=jnp.float32) + b2_ref[...]

    o_ref[...] = h2 + x


def attention_head_pallas(x_nchw, params, head):
    B, C, H, W = x_nchw.shape
    N = H * W
    qk_dim = params["wq"].shape[0]
    dqk = qk_dim // head
    dv = C // head
    G = B * head
    scale = 1.0 / float(np.sqrt(qk_dim / head))

    # NCHW -> (B*N, C), n = h*W + w (matches torch flatten(3) ordering).
    x = jnp.transpose(x_nchw, (0, 2, 3, 1)).reshape(B * N, C).astype(jnp.float32)

    # ---- one-time layout plumbing (wrapper side) ----
    # Fused, pre-transposed QKV weight; the 1/sqrt(dqk) score scale is folded into K.
    w_fused = jnp.concatenate(
        [params["wq"].T, params["wk"].T * scale, params["wv"].T], axis=1
    ).astype(jnp.bfloat16)                                            # (C, 2*qk_dim + C)
    # Additive term for the fused projection: biases + PE tiled over batches & heads.
    pe_full = jnp.tile(params["pe"], (B, head))                       # (B*N, qk_dim)
    addend = jnp.concatenate(
        [params["bq"] + pe_full,
         (params["bk"] + pe_full) * scale,
         jnp.broadcast_to(params["bv"], (B * N, C))], axis=1).astype(jnp.float32)

    # Constant masks that give the packed block-diagonal attention structure.
    g_row = np.arange(G * N) // N                     # group id (b*head + h) per key row
    h_row = g_row % head
    b_row = g_row // head
    kmask = (np.arange(qk_dim)[None, :] // dqk == h_row[:, None]).astype(np.float32)
    vmask = (np.arange(C)[None, :] // dv == h_row[:, None]).astype(np.float32)
    b_col = np.arange(B * N) // N
    smask = np.where(b_row[:, None] == b_col[None, :], 0.0, -1e30).astype(np.float32)
    kmask, vmask, smask = jnp.asarray(kmask), jnp.asarray(vmask), jnp.asarray(smask)

    w1T = params["w1"].T.astype(jnp.bfloat16)
    w2T = params["w2"].T.astype(jnp.bfloat16)
    b1 = params["b1"].astype(jnp.float32)
    b2 = params["b2"].astype(jnp.float32)

    inputs = (x, w_fused, addend, kmask, vmask, smask, w1T, b1, w2T, b2)

    # VMEM limit sized from actual buffers, capped by the physical per-core capacity
    # (v7x has only 64 MiB/TC; leave headroom for compiler-internal scratch).
    in_bytes = int(sum(int(a.size) * a.dtype.itemsize for a in inputs))
    out_bytes = int(B * N * C * 4)
    live_bytes = int(3 * (G * N) * (B * N) * 4 + in_bytes + out_bytes)
    try:
        phys = int(pltpu.get_tpu_info().vmem_capacity_bytes)
    except Exception:
        phys = 64 << 20
    cap = (3 * phys) // 4
    vmem_limit = int(min(max(4 * live_bytes, 16 << 20), cap))

    flops = int(2 * (B * N) * C * (2 * qk_dim + C)    # fused QKV projection
                + 2 * (G * N) * (B * N) * qk_dim      # packed scores
                + 2 * (B * N) * C * (G * N)           # packed P @ V
                + 2 * (B * N) * C * C * 2)            # two MLP matmuls
    transcendentals = int((G * N) * (B * N) + 2 * (B * N) * C + G * N)
    cost = pl.CostEstimate(flops=flops, transcendentals=transcendentals,
                           bytes_accessed=in_bytes + out_bytes)

    kernel = functools.partial(attention_head_kernel,
                               B=B, N=N, head=head, qk_dim=qk_dim)

    def full(a):
        return pl.BlockSpec(a.shape, lambda i: (0, 0))   # all operands are 2-D, full blocks

    out = pl.pallas_call(
        kernel,
        out_shape=jax.ShapeDtypeStruct((B * N, C), jnp.float32),
        grid_spec=pltpu.PrefetchScalarGridSpec(
            num_scalar_prefetch=0,
            grid=(1,),                                  # batch folded into rows (M = B*N)
            in_specs=[full(a) for a in inputs],
            out_specs=pl.BlockSpec((B * N, C), lambda i: (0, 0)),
        ),
        compiler_params=pltpu.CompilerParams(
            dimension_semantics=("arbitrary",),
            vmem_limit_bytes=vmem_limit,
        ),
        cost_estimate=cost,
    )(*inputs)

    return jnp.transpose(out.reshape(B, H, W, C), (0, 3, 1, 2))


def attention_head_reference(x, params, head):
    """Pure-JAX mirror of the PyTorch forward (NCHW), for validation."""
    B, C, H, W = x.shape
    qk_dim = params["wq"].shape[0]
    dqk = qk_dim // head
    dv = C // head
    N = H * W

    def conv1x1(t, w, b):
        return jnp.einsum("bchw,oc->bohw", t, w) + b.reshape(1, -1, 1, 1)

    pe_chw = params["pe"].T.reshape(dqk, H, W)

    q = conv1x1(x, params["wq"], params["bq"].reshape(-1)).reshape(B, head, dqk, H, W) + pe_chw
    k = conv1x1(x, params["wk"], params["bk"].reshape(-1)).reshape(B, head, dqk, H, W) + pe_chw
    v = conv1x1(x, params["wv"], params["bv"].reshape(-1)).reshape(B, head, dv, H, W)

    q = q.reshape(B, head, dqk, N).transpose(0, 1, 3, 2)   # (B, hd, N, dqk)
    k = k.reshape(B, head, dqk, N)                         # (B, hd, dqk, N)
    v = v.reshape(B, head, dv, N).transpose(0, 1, 3, 2)    # (B, hd, N, dv)

    qk = jnp.einsum("bhnd,bhdm->bhnm", q, k) / jnp.sqrt(qk_dim / head)
    qk = jax.nn.softmax(qk, axis=2)                        # softmax over QUERY axis (dim=2)
    out = jnp.einsum("bhnm,bhmd->bhnd", qk, v)
    out = out.transpose(0, 1, 3, 2).reshape(B, C, H, W)

    h1 = conv1x1(out, params["w1"], params["b1"].reshape(-1))
    mish = h1 * jnp.tanh(jax.nn.softplus(h1))
    out = conv1x1(mish, params["w2"], params["b2"].reshape(-1)) + x
    return out


def make_params(key, in_channels, squeeze, head, H, W):
    qk_dim = in_channels // squeeze
    dqk = qk_dim // head
    N = H * W
    ks = jax.random.split(key, 12)

    def w(k, shape, s=0.1):
        return (s * jax.random.normal(k, shape)).astype(jnp.float32)

    # Orthogonal PE (columns orthonormal), stored as (N, dqk) == PE.T flattened.
    a = jax.random.normal(ks[0], (N, dqk), dtype=jnp.float32)
    pe, _ = jnp.linalg.qr(a)

    return {
        "pe": pe.astype(jnp.float32),
        "wq": w(ks[1], (qk_dim, in_channels)), "bq": w(ks[2], (1, qk_dim)),
        "wk": w(ks[3], (qk_dim, in_channels)), "bk": w(ks[4], (1, qk_dim)),
        "wv": w(ks[5], (in_channels, in_channels)), "bv": w(ks[6], (1, in_channels)),
        "w1": w(ks[7], (in_channels, in_channels)), "b1": w(ks[8], (1, in_channels)),
        "w2": w(ks[9], (in_channels, in_channels)), "b2": w(ks[10], (1, in_channels)),
    }


if __name__ == "__main__":
    B, C, H, W = 2, 32, 8, 8
    squeeze, head = 4, 2

    key = jax.random.PRNGKey(0)
    kx, kp = jax.random.split(key)
    x = jax.random.normal(kx, (B, C, H, W), dtype=jnp.float32)
    params = make_params(kp, C, squeeze, head, H, W)

    out = attention_head_pallas(x, params, head)
    out = jax.block_until_ready(out)

    ref = attention_head_reference(x, params, head)
    # bf16 matmul operands + approx reciprocals -> relaxed tolerance (per review).
    np.testing.assert_allclose(np.asarray(out), np.asarray(ref), rtol=2e-2, atol=2e-2)

    print("KERNEL_OK")
</pallas_src>

<mosaic_0001>
module attributes {stable_mosaic.version = 11 : i64} {
  func.func @attention_head_kernel(%arg0: i32, %arg1: memref<128x32xf32, #tpu.memory_space<vmem>>, %arg2: memref<32x48xbf16, #tpu.memory_space<vmem>>, %arg3: memref<128x48xf32, #tpu.memory_space<vmem>>, %arg4: memref<256x8xf32, #tpu.memory_space<vmem>>, %arg5: memref<256x32xf32, #tpu.memory_space<vmem>>, %arg6: memref<256x128xf32, #tpu.memory_space<vmem>>, %arg7: memref<32x32xbf16, #tpu.memory_space<vmem>>, %arg8: memref<1x32xf32, #tpu.memory_space<vmem>>, %arg9: memref<32x32xbf16, #tpu.memory_space<vmem>>, %arg10: memref<1x32xf32, #tpu.memory_space<vmem>>, %arg11: memref<128x32xf32, #tpu.memory_space<vmem>>) attributes {dimension_semantics = [#tpu.dimension_semantics<arbitrary>], iteration_bounds = array<i64: 1>, scalar_prefetch = 0 : i64, scratch_operands = 0 : i64, tpu.core_type = #tpu.core_type<tc>, window_params = [{pipeline_mode = #tpu.pipeline_mode<synchronous>, transform_indices = @transform_0, window_bounds = array<i64: 128, 32>}, {pipeline_mode = #tpu.pipeline_mode<synchronous>, transform_indices = @transform_1, window_bounds = array<i64: 32, 48>}, {pipeline_mode = #tpu.pipeline_mode<synchronous>, transform_indices = @transform_2, window_bounds = array<i64: 128, 48>}, {pipeline_mode = #tpu.pipeline_mode<synchronous>, transform_indices = @transform_3, window_bounds = array<i64: 256, 8>}, {pipeline_mode = #tpu.pipeline_mode<synchronous>, transform_indices = @transform_4, window_bounds = array<i64: 256, 32>}, {pipeline_mode = #tpu.pipeline_mode<synchronous>, transform_indices = @transform_5, window_bounds = array<i64: 256, 128>}, {pipeline_mode = #tpu.pipeline_mode<synchronous>, transform_indices = @transform_6, window_bounds = array<i64: 32, 32>}, {pipeline_mode = #tpu.pipeline_mode<synchronous>, transform_indices = @transform_7, window_bounds = array<i64: 1, 32>}, {pipeline_mode = #tpu.pipeline_mode<synchronous>, transform_indices = @transform_8, window_bounds = array<i64: 32, 32>}, {pipeline_mode = #tpu.pipeline_mode<synchronous>, transform_indices = @transform_9, window_bounds = array<i64: 1, 32>}, {pipeline_mode = #tpu.pipeline_mode<synchronous>, transform_indices = @transform_10, window_bounds = array<i64: 128, 32>}]} {
    %c0 = arith.constant 0 : index
    %c0_0 = arith.constant 0 : index
    %0 = vector.load %arg1[%c0, %c0_0] : memref<128x32xf32, #tpu.memory_space<vmem>>, vector<128x32xf32>
    %1 = arith.truncf %0 : vector<128x32xf32> to vector<128x32xbf16>
    %c0_1 = arith.constant 0 : index
    %c0_2 = arith.constant 0 : index
    %2 = vector.load %arg2[%c0_1, %c0_2] : memref<32x48xbf16, #tpu.memory_space<vmem>>, vector<32x48xbf16>
    %cst = arith.constant dense<0.000000e+00> : vector<128x48xf32>
    %3 = tpu.matmul %1, %2, %cst {dimension_numbers = #tpu.dot_dimension_numbers<[1], [0], [0], [1], [0, 0, 1, 1], [], []>} : vector<128x32xbf16>, vector<32x48xbf16>, vector<128x48xf32> -> vector<128x48xf32>
    %c0_3 = arith.constant 0 : index
    %c0_4 = arith.constant 0 : index
    %4 = vector.load %arg3[%c0_3, %c0_4] : memref<128x48xf32, #tpu.memory_space<vmem>>, vector<128x48xf32>
    %5 = arith.addf %3, %4 : vector<128x48xf32>
    %6 = vector.extract_strided_slice %5 {offsets = [0, 0], sizes = [128, 8], strides = [1, 1]} : vector<128x48xf32> to vector<128x8xf32>
    %7 = vector.extract_strided_slice %5 {offsets = [0, 8], sizes = [128, 8], strides = [1, 1]} : vector<128x48xf32> to vector<128x8xf32>
    %8 = vector.extract_strided_slice %5 {offsets = [0, 16], sizes = [128, 32], strides = [1, 1]} : vector<128x48xf32> to vector<128x32xf32>
    %9 = vector.extract_strided_slice %7 {offsets = [0, 0], sizes = [64, 8], strides = [1, 1]} : vector<128x8xf32> to vector<64x8xf32>
    %10 = vector.extract_strided_slice %7 {offsets = [0, 0], sizes = [64, 8], strides = [1, 1]} : vector<128x8xf32> to vector<64x8xf32>
    %11 = vector.extract_strided_slice %7 {offsets = [64, 0], sizes = [64, 8], strides = [1, 1]} : vector<128x8xf32> to vector<64x8xf32>
    %12 = vector.extract_strided_slice %7 {offsets = [64, 0], sizes = [64, 8], strides = [1, 1]} : vector<128x8xf32> to vector<64x8xf32>
    %13 = tpu.concatenate %9, %10, %11, %12 in 0 : vector<64x8xf32>, vector<64x8xf32>, vector<64x8xf32>, vector<64x8xf32> -> vector<256x8xf32>
    %14 = vector.extract_strided_slice %8 {offsets = [0, 0], sizes = [64, 32], strides = [1, 1]} : vector<128x32xf32> to vector<64x32xf32>
    %15 = vector.extract_strided_slice %8 {offsets = [0, 0], sizes = [64, 32], strides = [1, 1]} : vector<128x32xf32> to vector<64x32xf32>
    %16 = vector.extract_strided_slice %8 {offsets = [64, 0], sizes = [64, 32], strides = [1, 1]} : vector<128x32xf32> to vector<64x32xf32>
    %17 = vector.extract_strided_slice %8 {offsets = [64, 0], sizes = [64, 32], strides = [1, 1]} : vector<128x32xf32> to vector<64x32xf32>
    %18 = tpu.concatenate %14, %15, %16, %17 in 0 : vector<64x32xf32>, vector<64x32xf32>, vector<64x32xf32>, vector<64x32xf32> -> vector<256x32xf32>
    %c0_5 = arith.constant 0 : index
    %c0_6 = arith.constant 0 : index
    %19 = vector.load %arg4[%c0_5, %c0_6] : memref<256x8xf32, #tpu.memory_space<vmem>>, vector<256x8xf32>
    %20 = arith.mulf %13, %19 : vector<256x8xf32>
    %21 = arith.truncf %20 : vector<256x8xf32> to vector<256x8xbf16>
    %c0_7 = arith.constant 0 : index
    %c0_8 = arith.constant 0 : index
    %22 = vector.load %arg5[%c0_7, %c0_8] : memref<256x32xf32, #tpu.memory_space<vmem>>, vector<256x32xf32>
    %23 = arith.mulf %18, %22 : vector<256x32xf32>
    %24 = arith.truncf %23 : vector<256x32xf32> to vector<256x32xbf16>
    %25 = arith.truncf %6 : vector<128x8xf32> to vector<128x8xbf16>
    %cst_9 = arith.constant dense<0.000000e+00> : vector<256x128xf32>
    %26 = tpu.matmul %21, %25, %cst_9 {dimension_numbers = #tpu.dot_dimension_numbers<[1], [1], [0], [0], [0, 0, 1, 0], [], []>} : vector<256x8xbf16>, vector<128x8xbf16>, vector<256x128xf32> -> vector<256x128xf32>
    %c0_10 = arith.constant 0 : index
    %c0_11 = arith.constant 0 : index
    %27 = vector.load %arg6[%c0_10, %c0_11] : memref<256x128xf32, #tpu.memory_space<vmem>>, vector<256x128xf32>
    %28 = arith.addf %26, %27 : vector<256x128xf32>
    %cst_12 = arith.constant dense<0xFF800000> : vector<256xf32>
    %29 = vector.multi_reduction <maximumf>, %28, %cst_12 [1] : vector<256x128xf32> to vector<256xf32>
    %30 = vector.shape_cast %29 : vector<256xf32> to vector<256x1xf32>
    %31 = vector.broadcast %30 : vector<256x1xf32> to vector<256x128xf32>
    %32 = arith.subf %28, %31 : vector<256x128xf32>
    %33 = math.exp %32 : vector<256x128xf32>
    %cst_13 = arith.constant dense<0.000000e+00> : vector<256xf32>
    %34 = vector.multi_reduction <add>, %33, %cst_13 [1] : vector<256x128xf32> to vector<256xf32>
    %35 = vector.shape_cast %34 : vector<256xf32> to vector<256x1xf32>
    %36 = tpu.reciprocal %35 {approx = true} : vector<256x1xf32> -> vector<256x1xf32>
    %37 = vector.broadcast %36 : vector<256x1xf32> to vector<256x128xf32>
    %38 = arith.mulf %33, %37 : vector<256x128xf32>
    %39 = arith.truncf %38 : vector<256x128xf32> to vector<256x128xbf16>
    %cst_14 = arith.constant dense<0.000000e+00> : vector<128x32xf32>
    %40 = tpu.matmul %39, %24, %cst_14 {dimension_numbers = #tpu.dot_dimension_numbers<[0], [0], [1], [1], [0, 1, 1, 1], [], []>} : vector<256x128xbf16>, vector<256x32xbf16>, vector<128x32xf32> -> vector<128x32xf32>
    %41 = arith.truncf %40 : vector<128x32xf32> to vector<128x32xbf16>
    %c0_15 = arith.constant 0 : index
    %c0_16 = arith.constant 0 : index
    %42 = vector.load %arg7[%c0_15, %c0_16] : memref<32x32xbf16, #tpu.memory_space<vmem>>, vector<32x32xbf16>
    %cst_17 = arith.constant dense<0.000000e+00> : vector<128x32xf32>
    %43 = tpu.matmul %41, %42, %cst_17 {dimension_numbers = #tpu.dot_dimension_numbers<[1], [0], [0], [1], [0, 0, 1, 1], [], []>} : vector<128x32xbf16>, vector<32x32xbf16>, vector<128x32xf32> -> vector<128x32xf32>
    %c0_18 = arith.constant 0 : index
    %c0_19 = arith.constant 0 : index
    %44 = vector.load %arg8[%c0_18, %c0_19] : memref<1x32xf32, #tpu.memory_space<vmem>>, vector<1x32xf32>
    %45 = vector.broadcast %44 : vector<1x32xf32> to vector<128x32xf32>
    %46 = arith.addf %43, %45 : vector<128x32xf32>
    %cst_20 = arith.constant 2.000000e+01 : f32
    %47 = vector.broadcast %cst_20 : f32 to vector<128x32xf32>
    %48 = arith.minimumf %46, %47 : vector<128x32xf32>
    %49 = math.exp %48 : vector<128x32xf32>
    %cst_21 = arith.constant 2.000000e+00 : f32
    %50 = vector.broadcast %cst_21 : f32 to vector<128x32xf32>
    %51 = arith.addf %49, %50 : vector<128x32xf32>
    %52 = arith.mulf %49, %51 : vector<128x32xf32>
    %cst_22 = arith.constant 2.000000e+01 : f32
    %53 = vector.broadcast %cst_22 : f32 to vector<128x32xf32>
    %54 = arith.cmpf ogt, %46, %53 : vector<128x32xf32>
    %cst_23 = arith.constant 2.000000e+00 : f32
    %55 = vector.broadcast %cst_23 : f32 to vector<128x32xf32>
    %56 = arith.addf %52, %55 : vector<128x32xf32>
    %57 = tpu.reciprocal %56 {approx = true} : vector<128x32xf32> -> vector<128x32xf32>
    %58 = arith.mulf %52, %57 : vector<128x32xf32>
    %cst_24 = arith.constant 1.000000e+00 : f32
    %59 = vector.broadcast %cst_24 : f32 to vector<128x32xf32>
    %60 = arith.select %54, %59, %58 : vector<128x32xi1>, vector<128x32xf32>
    %61 = arith.mulf %46, %60 : vector<128x32xf32>
    %62 = arith.truncf %61 : vector<128x32xf32> to vector<128x32xbf16>
    %c0_25 = arith.constant 0 : index
    %c0_26 = arith.constant 0 : index
    %63 = vector.load %arg9[%c0_25, %c0_26] : memref<32x32xbf16, #tpu.memory_space<vmem>>, vector<32x32xbf16>
    %cst_27 = arith.constant dense<0.000000e+00> : vector<128x32xf32>
    %64 = tpu.matmul %62, %63, %cst_27 {dimension_numbers = #tpu.dot_dimension_numbers<[1], [0], [0], [1], [0, 0, 1, 1], [], []>} : vector<128x32xbf16>, vector<32x32xbf16>, vector<128x32xf32> -> vector<128x32xf32>
    %c0_28 = arith.constant 0 : index
    %c0_29 = arith.constant 0 : index
    %65 = vector.load %arg10[%c0_28, %c0_29] : memref<1x32xf32, #tpu.memory_space<vmem>>, vector<1x32xf32>
    %66 = vector.broadcast %65 : vector<1x32xf32> to vector<128x32xf32>
    %67 = arith.addf %64, %66 : vector<128x32xf32>
    %68 = arith.addf %67, %0 : vector<128x32xf32>
    %c0_30 = arith.constant 0 : index
    %c0_31 = arith.constant 0 : index
    %69 = vector.load %arg11[%c0_30, %c0_31] : memref<128x32xf32, #tpu.memory_space<vmem>>, vector<128x32xf32>
    tpu.vector_store %arg11[%c0_30, %c0_31], %68 {strides = array<i32>} : memref<128x32xf32, #tpu.memory_space<vmem>>, vector<128x32xf32>,
    return
  }
  func.func @transform_0(%arg0: i32) -> (i32, i32) {
    %c0_i32 = arith.constant 0 : i32
    %c0_i32_0 = arith.constant 0 : i32
    %c0_i32_1 = arith.constant 0 : i32
    return %c0_i32, %c0_i32_0 : i32, i32
  }
  func.func @transform_1(%arg0: i32) -> (i32, i32) {
    %c0_i32 = arith.constant 0 : i32
    %c0_i32_0 = arith.constant 0 : i32
    %c0_i32_1 = arith.constant 0 : i32
    return %c0_i32, %c0_i32_0 : i32, i32
  }
  func.func @transform_2(%arg0: i32) -> (i32, i32) {
    %c0_i32 = arith.constant 0 : i32
    %c0_i32_0 = arith.constant 0 : i32
    %c0_i32_1 = arith.constant 0 : i32
    return %c0_i32, %c0_i32_0 : i32, i32
  }
  func.func @transform_3(%arg0: i32) -> (i32, i32) {
    %c0_i32 = arith.constant 0 : i32
    %c0_i32_0 = arith.constant 0 : i32
    %c0_i32_1 = arith.constant 0 : i32
    return %c0_i32, %c0_i32_0 : i32, i32
  }
  func.func @transform_4(%arg0: i32) -> (i32, i32) {
    %c0_i32 = arith.constant 0 : i32
    %c0_i32_0 = arith.constant 0 : i32
    %c0_i32_1 = arith.constant 0 : i32
    return %c0_i32, %c0_i32_0 : i32, i32
  }
  func.func @transform_5(%arg0: i32) -> (i32, i32) {
    %c0_i32 = arith.constant 0 : i32
    %c0_i32_0 = arith.constant 0 : i32
    %c0_i32_1 = arith.constant 0 : i32
    return %c0_i32, %c0_i32_0 : i32, i32
  }
  func.func @transform_6(%arg0: i32) -> (i32, i32) {
    %c0_i32 = arith.constant 0 : i32
    %c0_i32_0 = arith.constant 0 : i32
    %c0_i32_1 = arith.constant 0 : i32
    return %c0_i32, %c0_i32_0 : i32, i32
  }
  func.func @transform_7(%arg0: i32) -> (i32, i32) {
    %c0_i32 = arith.constant 0 : i32
    %c0_i32_0 = arith.constant 0 : i32
    %c0_i32_1 = arith.constant 0 : i32
    return %c0_i32, %c0_i32_0 : i32, i32
  }
  func.func @transform_8(%arg0: i32) -> (i32, i32) {
    %c0_i32 = arith.constant 0 : i32
    %c0_i32_0 = arith.constant 0 : i32
    %c0_i32_1 = arith.constant 0 : i32
    return %c0_i32, %c0_i32_0 : i32, i32
  }
  func.func @transform_9(%arg0: i32) -> (i32, i32) {
    %c0_i32 = arith.constant 0 : i32
    %c0_i32_0 = arith.constant 0 : i32
    %c0_i32_1 = arith.constant 0 : i32
    return %c0_i32, %c0_i32_0 : i32, i32
  }
  func.func @transform_10(%arg0: i32) -> (i32, i32) {
    %c0_i32 = arith.constant 0 : i32
    %c0_i32_0 = arith.constant 0 : i32
    %c0_i32_1 = arith.constant 0 : i32
    return %c0_i32, %c0_i32_0 : i32, i32
  }
}

</mosaic_0001>

<llo_original>
// kernel: tpu_custom_call.1
$region0: #{tpu_custom_call.1}
  #allocation0 [shape = 'u32[]', space=smem, size = 0x4, offset = 0x4, fixed_abs, tag = 'smem constant byte address 0x4 - core index']
  #allocation1 [shape = 'u32[144,128]{1,0:T(1,128)}', space=vmem, size = 0x12000, scoped, tag = 'internal scratch']
  %s0 = inlined_call_operand.vmem [shape: f32[128,32], index: 0, kind: input, shape index: {}]
  %s1 = inlined_call_operand.vmem [shape: bf16[32,48], index: 1, kind: input, shape index: {}]
  %s2 = inlined_call_operand.vmem [shape: f32[128,48], index: 2, kind: input, shape index: {}]
  %s3 = inlined_call_operand.vmem [shape: f32[256,8], index: 3, kind: input, shape index: {}]
  %s4 = inlined_call_operand.vmem [shape: f32[256,32], index: 4, kind: input, shape index: {}]
  %s5 = inlined_call_operand.vmem [shape: f32[256,128], index: 5, kind: input, shape index: {}]
  %s6 = inlined_call_operand.vmem [shape: bf16[32,32], index: 6, kind: input, shape index: {}]
  %s7 = inlined_call_operand.vmem [shape: f32[1,32], index: 7, kind: input, shape index: {}]
  %s8 = inlined_call_operand.vmem [shape: bf16[32,32], index: 8, kind: input, shape index: {}]
  %s9 = inlined_call_operand.vmem [shape: f32[1,32], index: 9, kind: input, shape index: {}]
  %s10 = inlined_call_operand.vmem [shape: f32[128,32], index: 10, kind: output, shape index: {}]
  %s11 = sld [smem:[#allocation0]]
  $region50: #{tpu_custom_call.1} parent=0
    _
  %s13 = ssub.s32 1, %s11
  %s14 = scalar_select 0, %s13, %s11
  // Predicated region
  $region2: #{tpu_custom_call.1} parent=0 // pred_check
    _
  $region3: #{tpu_custom_call.1} parent=0 // pred_check_branch
    %16 = sbr.rel (0) target = $region5
  $region4: #{tpu_custom_call.1} parent=0 // pred_region
    _
  $region5: #{tpu_custom_call.1} parent=0 // pred_fallthru
    _
  // Predicated region
  $region6: #{tpu_custom_call.1} parent=0 // pred_check
    _
  $region7: #{tpu_custom_call.1} parent=0 // pred_check_branch
    %18 = sbr.rel (0) target = $region9
  $region8: #{tpu_custom_call.1} parent=0 // pred_region
    _
  $region9: #{tpu_custom_call.1} parent=0 // pred_fallthru
    _
  // Predicated region
  $region10: #{tpu_custom_call.1} parent=0 // pred_check
    _
  $region11: #{tpu_custom_call.1} parent=0 // pred_check_branch
    %20 = sbr.rel (0) target = $region13
  $region12: #{tpu_custom_call.1} parent=0 // pred_region
    _
  $region13: #{tpu_custom_call.1} parent=0 // pred_fallthru
    _
  // Predicated region
  $region14: #{tpu_custom_call.1} parent=0 // pred_check
    _
  $region15: #{tpu_custom_call.1} parent=0 // pred_check_branch
    %22 = sbr.rel (0) target = $region17
  $region16: #{tpu_custom_call.1} parent=0 // pred_region
    _
  $region17: #{tpu_custom_call.1} parent=0 // pred_fallthru
    _
  // Predicated region
  $region18: #{tpu_custom_call.1} parent=0 // pred_check
    _
  $region19: #{tpu_custom_call.1} parent=0 // pred_check_branch
    %24 = sbr.rel (0) target = $region21
  $region20: #{tpu_custom_call.1} parent=0 // pred_region
    _
  $region21: #{tpu_custom_call.1} parent=0 // pred_fallthru
    _
  // Predicated region
  $region22: #{tpu_custom_call.1} parent=0 // pred_check
    _
  $region23: #{tpu_custom_call.1} parent=0 // pred_check_branch
    %26 = sbr.rel (0) target = $region25
  $region24: #{tpu_custom_call.1} parent=0 // pred_region
    _
  $region25: #{tpu_custom_call.1} parent=0 // pred_fallthru
    _
  // Predicated region
  $region26: #{tpu_custom_call.1} parent=0 // pred_check
    _
  $region27: #{tpu_custom_call.1} parent=0 // pred_check_branch
    %28 = sbr.rel (0) target = $region29
  $region28: #{tpu_custom_call.1} parent=0 // pred_region
    _
  $region29: #{tpu_custom_call.1} parent=0 // pred_fallthru
    _
  // Predicated region
  $region30: #{tpu_custom_call.1} parent=0 // pred_check
    _
  $region31: #{tpu_custom_call.1} parent=0 // pred_check_branch
    %30 = sbr.rel (0) target = $region33
  $region32: #{tpu_custom_call.1} parent=0 // pred_region
    _
  $region33: #{tpu_custom_call.1} parent=0 // pred_fallthru
    _
  // Predicated region
  $region34: #{tpu_custom_call.1} parent=0 // pred_check
    _
  $region35: #{tpu_custom_call.1} parent=0 // pred_check_branch
    %32 = sbr.rel (0) target = $region37
  $region36: #{tpu_custom_call.1} parent=0 // pred_region
    _
  $region37: #{tpu_custom_call.1} parent=0 // pred_fallthru
    _
  // Predicated region
  $region38: #{tpu_custom_call.1} parent=0 // pred_check
    _
  $region39: #{tpu_custom_call.1} parent=0 // pred_check_branch
    %34 = sbr.rel (0) target = $region41
  $region40: #{tpu_custom_call.1} parent=0 // pred_region
    _
  $region41: #{tpu_custom_call.1} parent=0 // pred_fallthru
    _
  %v36 = vld [vmem:[%s0] sm:$0xff]
  %v37 = vld [vmem:[%s0 + $0x8] sm:$0xff]
  %v38 = vld [vmem:[%s0 + $0x10] sm:$0xff]
  %v39 = vld [vmem:[%s0 + $0x18] sm:$0xff]
  %v40 = vld [vmem:[%s0 + $0x20] sm:$0xff]
  %v41 = vld [vmem:[%s0 + $0x28] sm:$0xff]
  %v42 = vld [vmem:[%s0 + $0x30] sm:$0xff]
  %v43 = vld [vmem:[%s0 + $0x38] sm:$0xff]
  %v44 = vld [vmem:[%s0 + $0x40] sm:$0xff]
  %v45 = vld [vmem:[%s0 + $0x48] sm:$0xff]
  %v46 = vld [vmem:[%s0 + $0x50] sm:$0xff]
  %v47 = vld [vmem:[%s0 + $0x58] sm:$0xff]
  %v48 = vld [vmem:[%s0 + $0x60] sm:$0xff]
  %v49 = vld [vmem:[%s0 + $0x68] sm:$0xff]
  %v50 = vld [vmem:[%s0 + $0x70] sm:$0xff]
  %v51 = vld [vmem:[%s0 + $0x78] sm:$0xff]
  %v52 = vpack.c.bf16 %v37, %v36
  %v53 = vpack.c.bf16 %v39, %v38
  %v54 = vpack.c.bf16 %v41, %v40
  %v55 = vpack.c.bf16 %v43, %v42
  %v56 = vpack.c.bf16 %v45, %v44
  %v57 = vpack.c.bf16 %v47, %v46
  %v58 = vpack.c.bf16 %v49, %v48
  %v59 = vpack.c.bf16 %v51, %v50
  %v60 = vld [vmem:[%s1] sm:$0xf]
  %v61 = vld [vmem:[%s1 + $0x4] sm:$0xf]
  %v62 = vld [vmem:[%s1 + $0x8] sm:$0xf]
  %v63 = vld [vmem:[%s1 + $0xc] sm:$0xf]
  %v64 = vld [vmem:[%s2] sm:$0xff]
  %v65 = vld [vmem:[%s2 + $0x8] sm:$0xff]
  %v66 = vld [vmem:[%s2 + $0x10] sm:$0xff]
  %v67 = vld [vmem:[%s2 + $0x18] sm:$0xff]
  %v68 = vld [vmem:[%s2 + $0x20] sm:$0xff]
  %v69 = vld [vmem:[%s2 + $0x28] sm:$0xff]
  %v70 = vld [vmem:[%s2 + $0x30] sm:$0xff]
  %v71 = vld [vmem:[%s2 + $0x38] sm:$0xff]
  %v72 = vld [vmem:[%s2 + $0x40] sm:$0xff]
  %v73 = vld [vmem:[%s2 + $0x48] sm:$0xff]
  %v74 = vld [vmem:[%s2 + $0x50] sm:$0xff]
  %v75 = vld [vmem:[%s2 + $0x58] sm:$0xff]
  %v76 = vld [vmem:[%s2 + $0x60] sm:$0xff]
  %v77 = vld [vmem:[%s2 + $0x68] sm:$0xff]
  %v78 = vld [vmem:[%s2 + $0x70] sm:$0xff]
  %v79 = vld [vmem:[%s2 + $0x78] sm:$0xff]
  %v84 = vunpack.c.l.b16 %v60
  %v85 = vunpack.c.l.b16 %v61
  %v86 = vunpack.c.l.b16 %v62
  %v87 = vunpack.c.l.b16 %v63
  %v88 = vpack.c.b16 %v85, %v84
  %v89 = vpack.c.b16 %v87, %v86
  %vm92 = vcmask 261120
  %v94 = vsel %vm92, %v52, 0
  %v97 = vsel %vm92, %v53, 0
  %v100 = vsel %vm92, %v54, 0
  %v103 = vsel %vm92, %v55, 0
  %v106 = vsel %vm92, %v56, 0
  %v109 = vsel %vm92, %v57, 0
  %v112 = vsel %vm92, %v58, 0
  %v115 = vsel %vm92, %v59, 0
  %117 = vmatprep.subr.bf16.mxu0 0
  %118 = vmatpush1.bf16.msra.mxu0 %v88
  %119 = vmatprep.subr.bf16.mxu0 0
  %120 = vmatpush1.bf16.msra.mxu0 %v89
  %121 = vmatprep.subr.bf16.mxu0 0
  %122 = vmatpush1.bf16.msra.mxu0 0
  %123 = vmatprep.subr.bf16.mxu0 0
  %124 = vmatpush1.bf16.msra.mxu0 0
  %125 = vmatprep.subr.bf16.mxu0 0
  %126 = vmatpush1.bf16.msra.mxu0 0
  %127 = vmatprep.subr.bf16.mxu0 0
  %128 = vmatpush1.bf16.msra.mxu0 0
  %129 = vmatprep.subr.bf16.mxu0 0
  %130 = vmatpush1.bf16.msra.mxu0 0
  %131 = vmatprep.subr.bf16.mxu0 0
  %132 = vmatpush1.bf16.msra.mxu0 0
  %133 = vmatprep.subr.bf16.mxu0 0
  %134 = vmatpush1.bf16.msra.mxu0 0
  %135 = vmatprep.subr.bf16.mxu0 0
  %136 = vmatpush1.bf16.msra.mxu0 0
  %137 = vmatprep.subr.bf16.mxu0 0
  %138 = vmatpush1.bf16.msra.mxu0 0
  %139 = vmatprep.subr.bf16.mxu0 0
  %140 = vmatpush1.bf16.msra.mxu0 0
  %141 = vmatprep.subr.bf16.mxu0 0
  %142 = vmatpush1.bf16.msra.mxu0 0
  %143 = vmatprep.subr.bf16.mxu0 0
  %144 = vmatpush1.bf16.msra.mxu0 0
  %145 = vmatprep.subr.bf16.mxu0 0
  %146 = vmatpush1.bf16.msra.mxu0 0
  %147 = vmatprep.subr.bf16.mxu0 0
  %148 = vmatpush1.bf16.msra.mxu0 0
  %149 = vmatprep.mubr.bf16.mxu0 0
  %150 = vmatmul.mubr.bf16.gmra.mrb[0].mxu0 %v94
  %v151 = vpop.f32.mrb[0].mxu0
  %v152 = vadd.f32 %v64, %v151
  %v153 = vpop.f32.mrb[0].mxu0
  %v154 = vpop.f32.mrb[0].mxu0
  %v155 = vadd.f32 %v65, %v154
  %v156 = vpop.f32.mrb[0].mxu0
  %157 = vmatprep.mubr.bf16.mxu0 0
  %158 = vmatmul.mubr.bf16.gmra.mrb[0].mxu0 %v97
  %v159 = vpop.f32.mrb[0].mxu0
  %v160 = vadd.f32 %v66, %v159
  %v161 = vpop.f32.mrb[0].mxu0
  %v162 = vpop.f32.mrb[0].mxu0
  %v163 = vadd.f32 %v67, %v162
  %v164 = vpop.f32.mrb[0].mxu0
  %165 = vmatprep.mubr.bf16.mxu0 0
  %166 = vmatmul.mubr.bf16.gmra.mrb[0].mxu0 %v100
  %v167 = vpop.f32.mrb[0].mxu0
  %v168 = vadd.f32 %v68, %v167
  %v169 = vpop.f32.mrb[0].mxu0
  %v170 = vpop.f32.mrb[0].mxu0
  %v171 = vadd.f32 %v69, %v170
  %v172 = vpop.f32.mrb[0].mxu0
  %173 = vmatprep.mubr.bf16.mxu0 0
  %174 = vmatmul.mubr.bf16.gmra.mrb[0].mxu0 %v103
  %v175 = vpop.f32.mrb[0].mxu0
  %v176 = vadd.f32 %v70, %v175
  %v177 = vpop.f32.mrb[0].mxu0
  %v178 = vpop.f32.mrb[0].mxu0
  %v179 = vadd.f32 %v71, %v178
  %v180 = vpop.f32.mrb[0].mxu0
  %181 = vmatprep.mubr.bf16.mxu0 0
  %182 = vmatmul.mubr.bf16.gmra.mrb[0].mxu0 %v106
  %v183 = vpop.f32.mrb[0].mxu0
  %v184 = vadd.f32 %v72, %v183
  %v185 = vpop.f32.mrb[0].mxu0
  %v186 = vpop.f32.mrb[0].mxu0
  %v187 = vadd.f32 %v73, %v186
  %v188 = vpop.f32.mrb[0].mxu0
  %189 = vmatprep.mubr.bf16.mxu0 0
  %190 = vmatmul.mubr.bf16.gmra.mrb[0].mxu0 %v109
  %v191 = vpop.f32.mrb[0].mxu0
  %v192 = vadd.f32 %v74, %v191
  %v193 = vpop.f32.mrb[0].mxu0
  %v194 = vpop.f32.mrb[0].mxu0
  %v195 = vadd.f32 %v75, %v194
  %v196 = vpop.f32.mrb[0].mxu0
  %197 = vmatprep.mubr.bf16.mxu0 0
  %198 = vmatmul.mubr.bf16.gmra.mrb[0].mxu0 %v112
  %v199 = vpop.f32.mrb[0].mxu0
  %v200 = vadd.f32 %v76, %v199
  %v201 = vpop.f32.mrb[0].mxu0
  %v202 = vpop.f32.mrb[0].mxu0
  %v203 = vadd.f32 %v77, %v202
  %v204 = vpop.f32.mrb[0].mxu0
  %205 = vmatprep.mubr.bf16.mxu0 0
  %206 = vmatmul.mubr.bf16.gmra.mrb[0].mxu0 %v115
  %v207 = vpop.f32.mrb[0].mxu0
  %v208 = vadd.f32 %v78, %v207
  %v209 = vpop.f32.mrb[0].mxu0
  %v210 = vpop.f32.mrb[0].mxu0
  %v211 = vadd.f32 %v79, %v210
  %v212 = vpop.f32.mrb[0].mxu0
  %213 = vdwg.mxu0
  %v214 = vld [vmem:[%s3] sm:$0xff]
  %v215 = vld [vmem:[%s3 + $0x8] sm:$0xff]
  %v216 = vld [vmem:[%s3 + $0x10] sm:$0xff]
  %v217 = vld [vmem:[%s3 + $0x18] sm:$0xff]
  %v218 = vld [vmem:[%s3 + $0x20] sm:$0xff]
  %v219 = vld [vmem:[%s3 + $0x28] sm:$0xff]
  %v220 = vld [vmem:[%s3 + $0x30] sm:$0xff]
  %v221 = vld [vmem:[%s3 + $0x38] sm:$0xff]
  %v222 = vld [vmem:[%s3 + $0x40] sm:$0xff]
  %v223 = vld [vmem:[%s3 + $0x48] sm:$0xff]
  %v224 = vld [vmem:[%s3 + $0x50] sm:$0xff]
  %v225 = vld [vmem:[%s3 + $0x58] sm:$0xff]
  %v226 = vld [vmem:[%s3 + $0x60] sm:$0xff]
  %v227 = vld [vmem:[%s3 + $0x68] sm:$0xff]
  %v228 = vld [vmem:[%s3 + $0x70] sm:$0xff]
  %v229 = vld [vmem:[%s3 + $0x78] sm:$0xff]
  %v230 = vld [vmem:[%s3 + $0x80] sm:$0xff]
  %v231 = vld [vmem:[%s3 + $0x88] sm:$0xff]
  %v232 = vld [vmem:[%s3 + $0x90] sm:$0xff]
  %v233 = vld [vmem:[%s3 + $0x98] sm:$0xff]
  %v234 = vld [vmem:[%s3 + $0xa0] sm:$0xff]
  %v235 = vld [vmem:[%s3 + $0xa8] sm:$0xff]
  %v236 = vld [vmem:[%s3 + $0xb0] sm:$0xff]
  %v237 = vld [vmem:[%s3 + $0xb8] sm:$0xff]
  %v238 = vld [vmem:[%s3 + $0xc0] sm:$0xff]
  %v239 = vld [vmem:[%s3 + $0xc8] sm:$0xff]
  %v240 = vld [vmem:[%s3 + $0xd0] sm:$0xff]
  %v241 = vld [vmem:[%s3 + $0xd8] sm:$0xff]
  %v242 = vld [vmem:[%s3 + $0xe0] sm:$0xff]
  %v243 = vld [vmem:[%s3 + $0xe8] sm:$0xff]
  %v244 = vld [vmem:[%s3 + $0xf0] sm:$0xff]
  %v245 = vld [vmem:[%s3 + $0xf8] sm:$0xff]
  %278 = vrot.lane.b32.xlu0 %v214, 8
  %v279 = vpop.permute.xlu0 %278
  %280 = vrot.lane.b32.xlu0 %v215, 8
  %v281 = vpop.permute.xlu0 %280
  %282 = vrot.lane.b32.xlu0 %v216, 8
  %v283 = vpop.permute.xlu0 %282
  %284 = vrot.lane.b32.xlu0 %v217, 8
  %v285 = vpop.permute.xlu0 %284
  %286 = vrot.lane.b32.xlu0 %v218, 8
  %v287 = vpop.permute.xlu0 %286
  %288 = vrot.lane.b32.xlu0 %v219, 8
  %v289 = vpop.permute.xlu0 %288
  %290 = vrot.lane.b32.xlu0 %v220, 8
  %v291 = vpop.permute.xlu0 %290
  %292 = vrot.lane.b32.xlu0 %v221, 8
  %v293 = vpop.permute.xlu0 %292
  %294 = vrot.lane.b32.xlu0 %v222, 8
  %v295 = vpop.permute.xlu0 %294
  %296 = vrot.lane.b32.xlu0 %v223, 8
  %v297 = vpop.permute.xlu0 %296
  %298 = vrot.lane.b32.xlu0 %v224, 8
  %v299 = vpop.permute.xlu0 %298
  %300 = vrot.lane.b32.xlu0 %v225, 8
  %v301 = vpop.permute.xlu0 %300
  %302 = vrot.lane.b32.xlu0 %v226, 8
  %v303 = vpop.permute.xlu0 %302
  %304 = vrot.lane.b32.xlu0 %v227, 8
  %v305 = vpop.permute.xlu0 %304
  %306 = vrot.lane.b32.xlu0 %v228, 8
  %v307 = vpop.permute.xlu0 %306
  %308 = vrot.lane.b32.xlu0 %v229, 8
  %v309 = vpop.permute.xlu0 %308
  %310 = vrot.lane.b32.xlu0 %v230, 8
  %v311 = vpop.permute.xlu0 %310
  %312 = vrot.lane.b32.xlu0 %v231, 8
  %v313 = vpop.permute.xlu0 %312
  %314 = vrot.lane.b32.xlu0 %v232, 8
  %v315 = vpop.permute.xlu0 %314
  %316 = vrot.lane.b32.xlu0 %v233, 8
  %v317 = vpop.permute.xlu0 %316
  %318 = vrot.lane.b32.xlu0 %v234, 8
  %v319 = vpop.permute.xlu0 %318
  %320 = vrot.lane.b32.xlu0 %v235, 8
  %v321 = vpop.permute.xlu0 %320
  %322 = vrot.lane.b32.xlu0 %v236, 8
  %v323 = vpop.permute.xlu0 %322
  %324 = vrot.lane.b32.xlu0 %v237, 8
  %v325 = vpop.permute.xlu0 %324
  %326 = vrot.lane.b32.xlu0 %v238, 8
  %v327 = vpop.permute.xlu0 %326
  %328 = vrot.lane.b32.xlu0 %v239, 8
  %v329 = vpop.permute.xlu0 %328
  %330 = vrot.lane.b32.xlu0 %v240, 8
  %v331 = vpop.permute.xlu0 %330
  %332 = vrot.lane.b32.xlu0 %v241, 8
  %v333 = vpop.permute.xlu0 %332
  %334 = vrot.lane.b32.xlu0 %v242, 8
  %v335 = vpop.permute.xlu0 %334
  %336 = vrot.lane.b32.xlu0 %v243, 8
  %v337 = vpop.permute.xlu0 %336
  %338 = vrot.lane.b32.xlu0 %v244, 8
  %v339 = vpop.permute.xlu0 %338
  %340 = vrot.lane.b32.xlu0 %v245, 8
  %v341 = vpop.permute.xlu0 %340
  %v374 = vmul.f32 %v152, %v279
  %v375 = vmul.f32 %v155, %v281
  %v376 = vmul.f32 %v160, %v283
  %v377 = vmul.f32 %v163, %v285
  %v378 = vmul.f32 %v168, %v287
  %v379 = vmul.f32 %v171, %v289
  %v380 = vmul.f32 %v176, %v291
  %v381 = vmul.f32 %v179, %v293
  %v382 = vmul.f32 %v152, %v295
  %v383 = vmul.f32 %v155, %v297
  %v384 = vmul.f32 %v160, %v299
  %v385 = vmul.f32 %v163, %v301
  %v386 = vmul.f32 %v168, %v303
  %v387 = vmul.f32 %v171, %v305
  %v388 = vmul.f32 %v176, %v307
  %v389 = vmul.f32 %v179, %v309
  %v390 = vmul.f32 %v184, %v311
  %v391 = vmul.f32 %v187, %v313
  %v392 = vmul.f32 %v192, %v315
  %v393 = vmul.f32 %v195, %v317
  %v394 = vmul.f32 %v200, %v319
  %v395 = vmul.f32 %v203, %v321
  %v396 = vmul.f32 %v208, %v323
  %v397 = vmul.f32 %v211, %v325
  %v398 = vmul.f32 %v184, %v327
  %v399 = vmul.f32 %v187, %v329
  %v400 = vmul.f32 %v192, %v331
  %v401 = vmul.f32 %v195, %v333
  %v402 = vmul.f32 %v200, %v335
  %v403 = vmul.f32 %v203, %v337
  %v404 = vmul.f32 %v208, %v339
  %v405 = vmul.f32 %v211, %v341
  %v406 = vpack.c.bf16 %v375, %v374
  %v407 = vpack.c.bf16 %v377, %v376
  %v408 = vpack.c.bf16 %v379, %v378
  %v409 = vpack.c.bf16 %v381, %v380
  %v410 = vpack.c.bf16 %v383, %v382
  %v411 = vpack.c.bf16 %v385, %v384
  %v412 = vpack.c.bf16 %v387, %v386
  %v413 = vpack.c.bf16 %v389, %v388
  %v414 = vpack.c.bf16 %v391, %v390
  %v415 = vpack.c.bf16 %v393, %v392
  %v416 = vpack.c.bf16 %v395, %v394
  %v417 = vpack.c.bf16 %v397, %v396
  %v418 = vpack.c.bf16 %v399, %v398
  %v419 = vpack.c.bf16 %v401, %v400
  %v420 = vpack.c.bf16 %v403, %v402
  %v421 = vpack.c.bf16 %v405, %v404
  %v422 = vld [vmem:[%s4] sm:$0xff]
  %v423 = vld [vmem:[%s4 + $0x8] sm:$0xff]
  %v424 = vld [vmem:[%s4 + $0x10] sm:$0xff]
  %v425 = vld [vmem:[%s4 + $0x18] sm:$0xff]
  %v426 = vld [vmem:[%s4 + $0x20] sm:$0xff]
  %v427 = vld [vmem:[%s4 + $0x28] sm:$0xff]
  %v428 = vld [vmem:[%s4 + $0x30] sm:$0xff]
  %v429 = vld [vmem:[%s4 + $0x38] sm:$0xff]
  %v430 = vld [vmem:[%s4 + $0x40] sm:$0xff]
  %v431 = vld [vmem:[%s4 + $0x48] sm:$0xff]
  %v432 = vld [vmem:[%s4 + $0x50] sm:$0xff]
  %v433 = vld [vmem:[%s4 + $0x58] sm:$0xff]
  %v434 = vld [vmem:[%s4 + $0x60] sm:$0xff]
  %v435 = vld [vmem:[%s4 + $0x68] sm:$0xff]
  %v436 = vld [vmem:[%s4 + $0x70] sm:$0xff]
  %v437 = vld [vmem:[%s4 + $0x78] sm:$0xff]
  %v438 = vld [vmem:[%s4 + $0x80] sm:$0xff]
  %v439 = vld [vmem:[%s4 + $0x88] sm:$0xff]
  %v440 = vld [vmem:[%s4 + $0x90] sm:$0xff]
  %v441 = vld [vmem:[%s4 + $0x98] sm:$0xff]
  %v442 = vld [vmem:[%s4 + $0xa0] sm:$0xff]
  %v443 = vld [vmem:[%s4 + $0xa8] sm:$0xff]
  %v444 = vld [vmem:[%s4 + $0xb0] sm:$0xff]
  %v445 = vld [vmem:[%s4 + $0xb8] sm:$0xff]
  %v446 = vld [vmem:[%s4 + $0xc0] sm:$0xff]
  %v447 = vld [vmem:[%s4 + $0xc8] sm:$0xff]
  %v448 = vld [vmem:[%s4 + $0xd0] sm:$0xff]
  %v449 = vld [vmem:[%s4 + $0xd8] sm:$0xff]
  %v450 = vld [vmem:[%s4 + $0xe0] sm:$0xff]
  %v451 = vld [vmem:[%s4 + $0xe8] sm:$0xff]
  %v452 = vld [vmem:[%s4 + $0xf0] sm:$0xff]
  %v453 = vld [vmem:[%s4 + $0xf8] sm:$0xff]
  %486 = vrot.lane.b32.xlu0 %v422, 16
  %v487 = vpop.permute.xlu0 %486
  %488 = vrot.lane.b32.xlu0 %v423, 16
  %v489 = vpop.permute.xlu0 %488
  %490 = vrot.lane.b32.xlu0 %v424, 16
  %v491 = vpop.permute.xlu0 %490
  %492 = vrot.lane.b32.xlu0 %v425, 16
  %v493 = vpop.permute.xlu0 %492
  %494 = vrot.lane.b32.xlu0 %v426, 16
  %v495 = vpop.permute.xlu0 %494
  %496 = vrot.lane.b32.xlu0 %v427, 16
  %v497 = vpop.permute.xlu0 %496
  %498 = vrot.lane.b32.xlu0 %v428, 16
  %v499 = vpop.permute.xlu0 %498
  %500 = vrot.lane.b32.xlu0 %v429, 16
  %v501 = vpop.permute.xlu0 %500
  %502 = vrot.lane.b32.xlu0 %v430, 16
  %v503 = vpop.permute.xlu0 %502
  %504 = vrot.lane.b32.xlu0 %v431, 16
  %v505 = vpop.permute.xlu0 %504
  %506 = vrot.lane.b32.xlu0 %v432, 16
  %v507 = vpop.permute.xlu0 %506
  %508 = vrot.lane.b32.xlu0 %v433, 16
  %v509 = vpop.permute.xlu0 %508
  %510 = vrot.lane.b32.xlu0 %v434, 16
  %v511 = vpop.permute.xlu0 %510
  %512 = vrot.lane.b32.xlu0 %v435, 16
  %v513 = vpop.permute.xlu0 %512
  %514 = vrot.lane.b32.xlu0 %v436, 16
  %v515 = vpop.permute.xlu0 %514
  %516 = vrot.lane.b32.xlu0 %v437, 16
  %v517 = vpop.permute.xlu0 %516
  %518 = vrot.lane.b32.xlu0 %v438, 16
  %v519 = vpop.permute.xlu0 %518
  %520 = vrot.lane.b32.xlu0 %v439, 16
  %v521 = vpop.permute.xlu0 %520
  %522 = vrot.lane.b32.xlu0 %v440, 16
  %v523 = vpop.permute.xlu0 %522
  %524 = vrot.lane.b32.xlu0 %v441, 16
  %v525 = vpop.permute.xlu0 %524
  %526 = vrot.lane.b32.xlu0 %v442, 16
  %v527 = vpop.permute.xlu0 %526
  %528 = vrot.lane.b32.xlu0 %v443, 16
  %v529 = vpop.permute.xlu0 %528
  %530 = vrot.lane.b32.xlu0 %v444, 16
  %v531 = vpop.permute.xlu0 %530
  %532 = vrot.lane.b32.xlu0 %v445, 16
  %v533 = vpop.permute.xlu0 %532
  %534 = vrot.lane.b32.xlu0 %v446, 16
  %v535 = vpop.permute.xlu0 %534
  %536 = vrot.lane.b32.xlu0 %v447, 16
  %v537 = vpop.permute.xlu0 %536
  %538 = vrot.lane.b32.xlu0 %v448, 16
  %v539 = vpop.permute.xlu0 %538
  %540 = vrot.lane.b32.xlu0 %v449, 16
  %v541 = vpop.permute.xlu0 %540
  %542 = vrot.lane.b32.xlu0 %v450, 16
  %v543 = vpop.permute.xlu0 %542
  %544 = vrot.lane.b32.xlu0 %v451, 16
  %v545 = vpop.permute.xlu0 %544
  %546 = vrot.lane.b32.xlu0 %v452, 16
  %v547 = vpop.permute.xlu0 %546
  %548 = vrot.lane.b32.xlu0 %v453, 16
  %v549 = vpop.permute.xlu0 %548
  %v582 = vmul.f32 %v152, %v487
  %v583 = vmul.f32 %v155, %v489
  %v584 = vmul.f32 %v160, %v491
  %v585 = vmul.f32 %v163, %v493
  %v586 = vmul.f32 %v168, %v495
  %v587 = vmul.f32 %v171, %v497
  %v588 = vmul.f32 %v176, %v499
  %v589 = vmul.f32 %v179, %v501
  %v590 = vmul.f32 %v152, %v503
  %v591 = vmul.f32 %v155, %v505
  %v592 = vmul.f32 %v160, %v507
  %v593 = vmul.f32 %v163, %v509
  %v594 = vmul.f32 %v168, %v511
  %v595 = vmul.f32 %v171, %v513
  %v596 = vmul.f32 %v176, %v515
  %v597 = vmul.f32 %v179, %v517
  %v598 = vmul.f32 %v184, %v519
  %v599 = vmul.f32 %v187, %v521
  %v600 = vmul.f32 %v192, %v523
  %v601 = vmul.f32 %v195, %v525
  %v602 = vmul.f32 %v200, %v527
  %v603 = vmul.f32 %v203, %v529
  %v604 = vmul.f32 %v208, %v531
  %v605 = vmul.f32 %v211, %v533
  %v606 = vmul.f32 %v184, %v535
  %v607 = vmul.f32 %v187, %v537
  %v608 = vmul.f32 %v192, %v539
  %v609 = vmul.f32 %v195, %v541
  %v610 = vmul.f32 %v200, %v543
  %v611 = vmul.f32 %v203, %v545
  %v612 = vmul.f32 %v208, %v547
  %v613 = vmul.f32 %v211, %v549
  %v614 = vpack.c.bf16 %v583, %v582
  %v615 = vpack.c.bf16 %v585, %v584
  %v616 = vpack.c.bf16 %v587, %v586
  %v617 = vpack.c.bf16 %v589, %v588
  %v618 = vpack.c.bf16 %v591, %v590
  %v619 = vpack.c.bf16 %v593, %v592
  %v620 = vpack.c.bf16 %v595, %v594
  %v621 = vpack.c.bf16 %v597, %v596
  %v622 = vpack.c.bf16 %v599, %v598
  %v623 = vpack.c.bf16 %v601, %v600
  %v624 = vpack.c.bf16 %v603, %v602
  %v625 = vpack.c.bf16 %v605, %v604
  %v626 = vpack.c.bf16 %v607, %v606
  %v627 = vpack.c.bf16 %v609, %v608
  %v628 = vpack.c.bf16 %v611, %v610
  %v629 = vpack.c.bf16 %v613, %v612
  %v630 = vpack.c.bf16 %v155, %v152
  %v631 = vpack.c.bf16 %v163, %v160
  %v632 = vpack.c.bf16 %v171, %v168
  %v633 = vpack.c.bf16 %v179, %v176
  %v634 = vpack.c.bf16 %v187, %v184
  %v635 = vpack.c.bf16 %v195, %v192
  %v636 = vpack.c.bf16 %v203, %v200
  %v637 = vpack.c.bf16 %v211, %v208
  %v638 = vld [vmem:[%s5] sm:$0xff]
  %v639 = vld [vmem:[%s5 + $0x8] sm:$0xff]
  %v640 = vld [vmem:[%s5 + $0x10] sm:$0xff]
  %v641 = vld [vmem:[%s5 + $0x18] sm:$0xff]
  %v642 = vld [vmem:[%s5 + $0x20] sm:$0xff]
  %v643 = vld [vmem:[%s5 + $0x28] sm:$0xff]
  %v644 = vld [vmem:[%s5 + $0x30] sm:$0xff]
  %v645 = vld [vmem:[%s5 + $0x38] sm:$0xff]
  %v646 = vld [vmem:[%s5 + $0x40] sm:$0xff]
  %v647 = vld [vmem:[%s5 + $0x48] sm:$0xff]
  %v648 = vld [vmem:[%s5 + $0x50] sm:$0xff]
  %v649 = vld [vmem:[%s5 + $0x58] sm:$0xff]
  %v650 = vld [vmem:[%s5 + $0x60] sm:$0xff]
  %v651 = vld [vmem:[%s5 + $0x68] sm:$0xff]
  %v652 = vld [vmem:[%s5 + $0x70] sm:$0xff]
  %v653 = vld [vmem:[%s5 + $0x78] sm:$0xff]
  %v654 = vld [vmem:[%s5 + $0x80] sm:$0xff]
  %v655 = vld [vmem:[%s5 + $0x88] sm:$0xff]
  %v656 = vld [vmem:[%s5 + $0x90] sm:$0xff]
  %v657 = vld [vmem:[%s5 + $0x98] sm:$0xff]
  %v658 = vld [vmem:[%s5 + $0xa0] sm:$0xff]
  %v659 = vld [vmem:[%s5 + $0xa8] sm:$0xff]
  %v660 = vld [vmem:[%s5 + $0xb0] sm:$0xff]
  %v661 = vld [vmem:[%s5 + $0xb8] sm:$0xff]
  %v662 = vld [vmem:[%s5 + $0xc0] sm:$0xff]
  %v663 = vld [vmem:[%s5 + $0xc8] sm:$0xff]
  %v664 = vld [vmem:[%s5 + $0xd0] sm:$0xff]
  %v665 = vld [vmem:[%s5 + $0xd8] sm:$0xff]
  %v666 = vld [vmem:[%s5 + $0xe0] sm:$0xff]
  %v667 = vld [vmem:[%s5 + $0xe8] sm:$0xff]
  %v668 = vld [vmem:[%s5 + $0xf0] sm:$0xff]
  %v669 = vld [vmem:[%s5 + $0xf8] sm:$0xff]
  %686 = vrot.lane.b32.xlu0 %v406, 120
  %v687 = vpop.permute.xlu0 %686
  %688 = vrot.lane.b32.xlu0 %v407, 120
  %v689 = vpop.permute.xlu0 %688
  %690 = vrot.lane.b32.xlu0 %v408, 120
  %v691 = vpop.permute.xlu0 %690
  %692 = vrot.lane.b32.xlu0 %v409, 120
  %v693 = vpop.permute.xlu0 %692
  %694 = vrot.lane.b32.xlu0 %v410, 120
  %v695 = vpop.permute.xlu0 %694
  %696 = vrot.lane.b32.xlu0 %v411, 120
  %v697 = vpop.permute.xlu0 %696
  %698 = vrot.lane.b32.xlu0 %v412, 120
  %v699 = vpop.permute.xlu0 %698
  %700 = vrot.lane.b32.xlu0 %v413, 120
  %v701 = vpop.permute.xlu0 %700
  %702 = vrot.lane.b32.xlu0 %v414, 120
  %v703 = vpop.permute.xlu0 %702
  %704 = vrot.lane.b32.xlu0 %v415, 120
  %v705 = vpop.permute.xlu0 %704
  %706 = vrot.lane.b32.xlu0 %v416, 120
  %v707 = vpop.permute.xlu0 %706
  %708 = vrot.lane.b32.xlu0 %v417, 120
  %v709 = vpop.permute.xlu0 %708
  %710 = vrot.lane.b32.xlu0 %v418, 120
  %v711 = vpop.permute.xlu0 %710
  %712 = vrot.lane.b32.xlu0 %v419, 120
  %v713 = vpop.permute.xlu0 %712
  %714 = vrot.lane.b32.xlu0 %v420, 120
  %v715 = vpop.permute.xlu0 %714
  %716 = vrot.lane.b32.xlu0 %v421, 120
  %v717 = vpop.permute.xlu0 %716
  %vm718 = vcmask 64512
  %v720 = vsel %vm718, %v687, 0
  %v723 = vsel %vm718, %v689, 0
  %v726 = vsel %vm718, %v691, 0
  %v729 = vsel %vm718, %v693, 0
  %v732 = vsel %vm718, %v695, 0
  %v735 = vsel %vm718, %v697, 0
  %v738 = vsel %vm718, %v699, 0
  %v741 = vsel %vm718, %v701, 0
  %v744 = vsel %vm718, %v703, 0
  %v747 = vsel %vm718, %v705, 0
  %v750 = vsel %vm718, %v707, 0
  %v753 = vsel %vm718, %v709, 0
  %v756 = vsel %vm718, %v711, 0
  %v759 = vsel %vm718, %v713, 0
  %v762 = vsel %vm718, %v715, 0
  %v765 = vsel %vm718, %v717, 0
  %v768 = vsel %vm718, %v630, 0
  %v771 = vsel %vm718, %v631, 0
  %v774 = vsel %vm718, %v632, 0
  %v777 = vsel %vm718, %v633, 0
  %v780 = vsel %vm718, %v634, 0
  %v783 = vsel %vm718, %v635, 0
  %v786 = vsel %vm718, %v636, 0
  %v789 = vsel %vm718, %v637, 0
  %791 = vmatprep.subr.bf16.mxu0 0
  %792 = vmatpush1.bf16.xpose.msra.mxu0 %v768
  %793 = vmatprep.subr.bf16.mxu0 0
  %794 = vmatpush1.bf16.xpose.msra.mxu0 %v771
  %795 = vmatprep.subr.bf16.mxu0 0
  %796 = vmatpush1.bf16.xpose.msra.mxu0 %v774
  %797 = vmatprep.subr.bf16.mxu0 0
  %798 = vmatpush1.bf16.xpose.msra.mxu0 %v777
  %799 = vmatprep.subr.bf16.mxu0 0
  %800 = vmatpush1.bf16.xpose.msra.mxu0 %v780
  %801 = vmatprep.subr.bf16.mxu0 0
  %802 = vmatpush1.bf16.xpose.msra.mxu0 %v783
  %803 = vmatprep.subr.bf16.mxu0 0
  %804 = vmatpush1.bf16.xpose.msra.mxu0 %v786
  %805 = vmatprep.subr.bf16.mxu0 0
  %806 = vmatpush1.bf16.xpose.msra.mxu0 %v789
  %807 = vmatprep.subr.bf16.mxu0 0
  %808 = vmatpush1.bf16.xpose.msra.mxu0 0
  %809 = vmatprep.subr.bf16.mxu0 0
  %810 = vmatpush1.bf16.xpose.msra.mxu0 0
  %811 = vmatprep.subr.bf16.mxu0 0
  %812 = vmatpush1.bf16.xpose.msra.mxu0 0
  %813 = vmatprep.subr.bf16.mxu0 0
  %814 = vmatpush1.bf16.xpose.msra.mxu0 0
  %815 = vmatprep.subr.bf16.mxu0 0
  %816 = vmatpush1.bf16.xpose.msra.mxu0 0
  %817 = vmatprep.subr.bf16.mxu0 0
  %818 = vmatpush1.bf16.xpose.msra.mxu0 0
  %819 = vmatprep.subr.bf16.mxu0 0
  %820 = vmatpush1.bf16.xpose.msra.mxu0 0
  %821 = vmatprep.subr.bf16.mxu0 0
  %822 = vmatpush1.bf16.xpose.msra.mxu0 0
  %823 = vmatprep.mubr.bf16.mxu0 0
  %824 = vmatmul.mubr.bf16.gmra.mrb[0].mxu0 %v720
  %v825 = vpop.f32.mrb[0].mxu0
  %v826 = vadd.f32 %v638, %v825
  %v827 = vpop.f32.mrb[0].mxu0
  %v828 = vpop.f32.mrb[0].mxu0
  %v829 = vadd.f32 %v639, %v828
  %v830 = vpop.f32.mrb[0].mxu0
  %831 = vmatprep.mubr.bf16.mxu0 0
  %832 = vmatmul.mubr.bf16.gmra.mrb[0].mxu0 %v723
  %v833 = vpop.f32.mrb[0].mxu0
  %v834 = vadd.f32 %v640, %v833
  %v835 = vpop.f32.mrb[0].mxu0
  %v836 = vpop.f32.mrb[0].mxu0
  %v837 = vadd.f32 %v641, %v836
  %v838 = vpop.f32.mrb[0].mxu0
  %839 = vmatprep.mubr.bf16.mxu0 0
  %840 = vmatmul.mubr.bf16.gmra.mrb[0].mxu0 %v726
  %v841 = vpop.f32.mrb[0].mxu0
  %v842 = vadd.f32 %v642, %v841
  %v843 = vpop.f32.mrb[0].mxu0
  %v844 = vpop.f32.mrb[0].mxu0
  %v845 = vadd.f32 %v643, %v844
  %v846 = vpop.f32.mrb[0].mxu0
  %847 = vmatprep.mubr.bf16.mxu0 0
  %848 = vmatmul.mubr.bf16.gmra.mrb[0].mxu0 %v729
  %v849 = vpop.f32.mrb[0].mxu0
  %v850 = vadd.f32 %v644, %v849
  %v851 = vpop.f32.mrb[0].mxu0
  %v852 = vpop.f32.mrb[0].mxu0
  %v853 = vadd.f32 %v645, %v852
  %v854 = vpop.f32.mrb[0].mxu0
  %855 = vmatprep.mubr.bf16.mxu0 0
  %856 = vmatmul.mubr.bf16.gmra.mrb[0].mxu0 %v732
  %v857 = vpop.f32.mrb[0].mxu0
  %v858 = vadd.f32 %v646, %v857
  %v859 = vpop.f32.mrb[0].mxu0
  %v860 = vpop.f32.mrb[0].mxu0
  %v861 = vadd.f32 %v647, %v860
  %v862 = vpop.f32.mrb[0].mxu0
  %863 = vmatprep.mubr.bf16.mxu0 0
  %864 = vmatmul.mubr.bf16.gmra.mrb[0].mxu0 %v735
  %v865 = vpop.f32.mrb[0].mxu0
  %v866 = vadd.f32 %v648, %v865
  %v867 = vpop.f32.mrb[0].mxu0
  %v868 = vpop.f32.mrb[0].mxu0
  %v869 = vadd.f32 %v649, %v868
  %v870 = vpop.f32.mrb[0].mxu0
  %871 = vmatprep.mubr.bf16.mxu0 0
  %872 = vmatmul.mubr.bf16.gmra.mrb[0].mxu0 %v738
  %v873 = vpop.f32.mrb[0].mxu0
  %v874 = vadd.f32 %v650, %v873
  %v875 = vpop.f32.mrb[0].mxu0
  %v876 = vpop.f32.mrb[0].mxu0
  %v877 = vadd.f32 %v651, %v876
  %v878 = vpop.f32.mrb[0].mxu0
  %879 = vmatprep.mubr.bf16.mxu0 0
  %880 = vmatmul.mubr.bf16.gmra.mrb[0].mxu0 %v741
  %v881 = vpop.f32.mrb[0].mxu0
  %v882 = vadd.f32 %v652, %v881
  %v883 = vpop.f32.mrb[0].mxu0
  %v884 = vpop.f32.mrb[0].mxu0
  %v885 = vadd.f32 %v653, %v884
  %v886 = vpop.f32.mrb[0].mxu0
  %887 = vmatprep.mubr.bf16.mxu0 0
  %888 = vmatmul.mubr.bf16.gmra.mrb[0].mxu0 %v744
  %v889 = vpop.f32.mrb[0].mxu0
  %v890 = vadd.f32 %v654, %v889
  %v891 = vpop.f32.mrb[0].mxu0
  %v892 = vpop.f32.mrb[0].mxu0
  %v893 = vadd.f32 %v655, %v892
  %v894 = vpop.f32.mrb[0].mxu0
  %895 = vmatprep.mubr.bf16.mxu0 0
  %896 = vmatmul.mubr.bf16.gmra.mrb[0].mxu0 %v747
  %v897 = vpop.f32.mrb[0].mxu0
  %v898 = vadd.f32 %v656, %v897
  %v899 = vpop.f32.mrb[0].mxu0
  %v900 = vpop.f32.mrb[0].mxu0
  %v901 = vadd.f32 %v657, %v900
  %v902 = vpop.f32.mrb[0].mxu0
  %903 = vmatprep.mubr.bf16.mxu0 0
  %904 = vmatmul.mubr.bf16.gmra.mrb[0].mxu0 %v750
  %v905 = vpop.f32.mrb[0].mxu0
  %v906 = vadd.f32 %v658, %v905
  %v907 = vpop.f32.mrb[0].mxu0
  %v908 = vpop.f32.mrb[0].mxu0
  %v909 = vadd.f32 %v659, %v908
  %v910 = vpop.f32.mrb[0].mxu0
  %911 = vmatprep.mubr.bf16.mxu0 0
  %912 = vmatmul.mubr.bf16.gmra.mrb[0].mxu0 %v753
  %v913 = vpop.f32.mrb[0].mxu0
  %v914 = vadd.f32 %v660, %v913
  %v915 = vpop.f32.mrb[0].mxu0
  %v916 = vpop.f32.mrb[0].mxu0
  %v917 = vadd.f32 %v661, %v916
  %v918 = vpop.f32.mrb[0].mxu0
  %919 = vmatprep.mubr.bf16.mxu0 0
  %920 = vmatmul.mubr.bf16.gmra.mrb[0].mxu0 %v756
  %v921 = vpop.f32.mrb[0].mxu0
  %v922 = vadd.f32 %v662, %v921
  %v923 = vpop.f32.mrb[0].mxu0
  %v924 = vpop.f32.mrb[0].mxu0
  %v925 = vadd.f32 %v663, %v924
  %v926 = vpop.f32.mrb[0].mxu0
  %927 = vmatprep.mubr.bf16.mxu0 0
  %928 = vmatmul.mubr.bf16.gmra.mrb[0].mxu0 %v759
  %v929 = vpop.f32.mrb[0].mxu0
  %v930 = vadd.f32 %v664, %v929
  %v931 = vpop.f32.mrb[0].mxu0
  %v932 = vpop.f32.mrb[0].mxu0
  %v933 = vadd.f32 %v665, %v932
  %v934 = vpop.f32.mrb[0].mxu0
  %935 = vmatprep.mubr.bf16.mxu0 0
  %936 = vmatmul.mubr.bf16.gmra.mrb[0].mxu0 %v762
  %v937 = vpop.f32.mrb[0].mxu0
  %v938 = vadd.f32 %v666, %v937
  %v939 = vpop.f32.mrb[0].mxu0
  %v940 = vpop.f32.mrb[0].mxu0
  %v941 = vadd.f32 %v667, %v940
  %v942 = vpop.f32.mrb[0].mxu0
  %943 = vmatprep.mubr.bf16.mxu0 0
  %944 = vmatmul.mubr.bf16.gmra.mrb[0].mxu0 %v765
  %v945 = vpop.f32.mrb[0].mxu0
  %v946 = vadd.f32 %v668, %v945
  %v947 = vpop.f32.mrb[0].mxu0
  %v948 = vpop.f32.mrb[0].mxu0
  %v949 = vadd.f32 %v669, %v948
  %v950 = vpop.f32.mrb[0].mxu0
  %951 = vdwg.mxu0
  %952 = vmax.xlane.f32.xlu0 %v826
  %v953 = vpop.xlane.xlu0 %952
  %954 = vmax.xlane.f32.xlu0 %v829
  %v955 = vpop.xlane.xlu0 %954
  %956 = vmax.xlane.f32.xlu0 %v834
  %v957 = vpop.xlane.xlu0 %956
  %958 = vmax.xlane.f32.xlu0 %v837
  %v959 = vpop.xlane.xlu0 %958
  %960 = vmax.xlane.f32.xlu0 %v842
  %v961 = vpop.xlane.xlu0 %960
  %962 = vmax.xlane.f32.xlu0 %v845
  %v963 = vpop.xlane.xlu0 %962
  %964 = vmax.xlane.f32.xlu0 %v850
  %v965 = vpop.xlane.xlu0 %964
  %966 = vmax.xlane.f32.xlu0 %v853
  %v967 = vpop.xlane.xlu0 %966
  %968 = vmax.xlane.f32.xlu0 %v858
  %v969 = vpop.xlane.xlu0 %968
  %970 = vmax.xlane.f32.xlu0 %v861
  %v971 = vpop.xlane.xlu0 %970
  %972 = vmax.xlane.f32.xlu0 %v866
  %v973 = vpop.xlane.xlu0 %972
  %974 = vmax.xlane.f32.xlu0 %v869
  %v975 = vpop.xlane.xlu0 %974
  %976 = vmax.xlane.f32.xlu0 %v874
  %v977 = vpop.xlane.xlu0 %976
  %978 = vmax.xlane.f32.xlu0 %v877
  %v979 = vpop.xlane.xlu0 %978
  %980 = vmax.xlane.f32.xlu0 %v882
  %v981 = vpop.xlane.xlu0 %980
  %982 = vmax.xlane.f32.xlu0 %v885
  %v983 = vpop.xlane.xlu0 %982
  %984 = vmax.xlane.f32.xlu0 %v890
  %v985 = vpop.xlane.xlu0 %984
  %986 = vmax.xlane.f32.xlu0 %v893
  %v987 = vpop.xlane.xlu0 %986
  %988 = vmax.xlane.f32.xlu0 %v898
  %v989 = vpop.xlane.xlu0 %988
  %990 = vmax.xlane.f32.xlu0 %v901
  %v991 = vpop.xlane.xlu0 %990
  %992 = vmax.xlane.f32.xlu0 %v906
  %v993 = vpop.xlane.xlu0 %992
  %994 = vmax.xlane.f32.xlu0 %v909
  %v995 = vpop.xlane.xlu0 %994
  %996 = vmax.xlane.f32.xlu0 %v914
  %v997 = vpop.xlane.xlu0 %996
  %998 = vmax.xlane.f32.xlu0 %v917
  %v999 = vpop.xlane.xlu0 %998
  %1000 = vmax.xlane.f32.xlu0 %v922
  %v1001 = vpop.xlane.xlu0 %1000
  %1002 = vmax.xlane.f32.xlu0 %v925
  %v1003 = vpop.xlane.xlu0 %1002
  %1004 = vmax.xlane.f32.xlu0 %v930
  %v1005 = vpop.xlane.xlu0 %1004
  %1006 = vmax.xlane.f32.xlu0 %v933
  %v1007 = vpop.xlane.xlu0 %1006
  %1008 = vmax.xlane.f32.xlu0 %v938
  %v1009 = vpop.xlane.xlu0 %1008
  %1010 = vmax.xlane.f32.xlu0 %v941
  %v1011 = vpop.xlane.xlu0 %1010
  %1012 = vmax.xlane.f32.xlu0 %v946
  %v1013 = vpop.xlane.xlu0 %1012
  %1014 = vmax.xlane.f32.xlu0 %v949
  %v1015 = vpop.xlane.xlu0 %1014
  %v1016 = vsub.f32 %v826, %v953
  %v1017 = vsub.f32 %v829, %v955
  %v1018 = vsub.f32 %v834, %v957
  %v1019 = vsub.f32 %v837, %v959
  %v1020 = vsub.f32 %v842, %v961
  %v1021 = vsub.f32 %v845, %v963
  %v1022 = vsub.f32 %v850, %v965
  %v1023 = vsub.f32 %v853, %v967
  %v1024 = vsub.f32 %v858, %v969
  %v1025 = vsub.f32 %v861, %v971
  %v1026 = vsub.f32 %v866, %v973
  %v1027 = vsub.f32 %v869, %v975
  %v1028 = vsub.f32 %v874, %v977
  %v1029 = vsub.f32 %v877, %v979
  %v1030 = vsub.f32 %v882, %v981
  %v1031 = vsub.f32 %v885, %v983
  %v1032 = vsub.f32 %v890, %v985
  %v1033 = vsub.f32 %v893, %v987
  %v1034 = vsub.f32 %v898, %v989
  %v1035 = vsub.f32 %v901, %v991
  %v1036 = vsub.f32 %v906, %v993
  %v1037 = vsub.f32 %v909, %v995
  %v1038 = vsub.f32 %v914, %v997
  %v1039 = vsub.f32 %v917, %v999
  %v1040 = vsub.f32 %v922, %v1001
  %v1041 = vsub.f32 %v925, %v1003
  %v1042 = vsub.f32 %v930, %v1005
  %v1043 = vsub.f32 %v933, %v1007
  %v1044 = vsub.f32 %v938, %v1009
  %v1045 = vsub.f32 %v941, %v1011
  %v1046 = vsub.f32 %v946, %v1013
  %v1047 = vsub.f32 %v949, %v1015
  %v1048 = vmul.f32 %v1016, 1.442695
  %v1049 = vpow.pop %v1048
  %v1050 = vmul.f32 %v1017, 1.442695
  %v1051 = vpow.pop %v1050
  %v1052 = vmul.f32 %v1018, 1.442695
  %v1053 = vpow.pop %v1052
  %v1054 = vmul.f32 %v1019, 1.442695
  %v1055 = vpow.pop %v1054
  %v1056 = vmul.f32 %v1020, 1.442695
  %v1057 = vpow.pop %v1056
  %v1058 = vmul.f32 %v1021, 1.442695
  %v1059 = vpow.pop %v1058
  %v1060 = vmul.f32 %v1022, 1.442695
  %v1061 = vpow.pop %v1060
  %v1062 = vmul.f32 %v1023, 1.442695
  %v1063 = vpow.pop %v1062
  %v1064 = vmul.f32 %v1024, 1.442695
  %v1065 = vpow.pop %v1064
  %v1066 = vmul.f32 %v1025, 1.442695
  %v1067 = vpow.pop %v1066
  %v1068 = vmul.f32 %v1026, 1.442695
  %v1069 = vpow.pop %v1068
  %v1070 = vmul.f32 %v1027, 1.442695
  %v1071 = vpow.pop %v1070
  %v1072 = vmul.f32 %v1028, 1.442695
  %v1073 = vpow.pop %v1072
  %v1074 = vmul.f32 %v1029, 1.442695
  %v1075 = vpow.pop %v1074
  %v1076 = vmul.f32 %v1030, 1.442695
  %v1077 = vpow.pop %v1076
  %v1078 = vmul.f32 %v1031, 1.442695
  %v1079 = vpow.pop %v1078
  %v1080 = vmul.f32 %v1032, 1.442695
  %v1081 = vpow.pop %v1080
  %v1082 = vmul.f32 %v1033, 1.442695
  %v1083 = vpow.pop %v1082
  %v1084 = vmul.f32 %v1034, 1.442695
  %v1085 = vpow.pop %v1084
  %v1086 = vmul.f32 %v1035, 1.442695
  %v1087 = vpow.pop %v1086
  %v1088 = vmul.f32 %v1036, 1.442695
  %v1089 = vpow.pop %v1088
  %v1090 = vmul.f32 %v1037, 1.442695
  %v1091 = vpow.pop %v1090
  %v1092 = vmul.f32 %v1038, 1.442695
  %v1093 = vpow.pop %v1092
  %v1094 = vmul.f32 %v1039, 1.442695
  %v1095 = vpow.pop %v1094
  %v1096 = vmul.f32 %v1040, 1.442695
  %v1097 = vpow.pop %v1096
  %v1098 = vmul.f32 %v1041, 1.442695
  %v1099 = vpow.pop %v1098
  %v1100 = vmul.f32 %v1042, 1.442695
  %v1101 = vpow.pop %v1100
  %v1102 = vmul.f32 %v1043, 1.442695
  %v1103 = vpow.pop %v1102
  %v1104 = vmul.f32 %v1044, 1.442695
  %v1105 = vpow.pop %v1104
  %v1106 = vmul.f32 %v1045, 1.442695
  %v1107 = vpow.pop %v1106
  %v1108 = vmul.f32 %v1046, 1.442695
  %v1109 = vpow.pop %v1108
  %v1110 = vmul.f32 %v1047, 1.442695
  %v1111 = vpow.pop %v1110
  %1112 = vadd.xlane.f32.xlu0 %v1049
  %v1113 = vpop.xlane.xlu0 %1112
  %1114 = vadd.xlane.f32.xlu0 %v1051
  %v1115 = vpop.xlane.xlu0 %1114
  %1116 = vadd.xlane.f32.xlu0 %v1053
  %v1117 = vpop.xlane.xlu0 %1116
  %1118 = vadd.xlane.f32.xlu0 %v1055
  %v1119 = vpop.xlane.xlu0 %1118
  %1120 = vadd.xlane.f32.xlu0 %v1057
  %v1121 = vpop.xlane.xlu0 %1120
  %1122 = vadd.xlane.f32.xlu0 %v1059
  %v1123 = vpop.xlane.xlu0 %1122
  %1124 = vadd.xlane.f32.xlu0 %v1061
  %v1125 = vpop.xlane.xlu0 %1124
  %1126 = vadd.xlane.f32.xlu0 %v1063
  %v1127 = vpop.xlane.xlu0 %1126
  %1128 = vadd.xlane.f32.xlu0 %v1065
  %v1129 = vpop.xlane.xlu0 %1128
  %1130 = vadd.xlane.f32.xlu0 %v1067
  %v1131 = vpop.xlane.xlu0 %1130
  %1132 = vadd.xlane.f32.xlu0 %v1069
  %v1133 = vpop.xlane.xlu0 %1132
  %1134 = vadd.xlane.f32.xlu0 %v1071
  %v1135 = vpop.xlane.xlu0 %1134
  %1136 = vadd.xlane.f32.xlu0 %v1073
  %v1137 = vpop.xlane.xlu0 %1136
  %1138 = vadd.xlane.f32.xlu0 %v1075
  %v1139 = vpop.xlane.xlu0 %1138
  %1140 = vadd.xlane.f32.xlu0 %v1077
  %v1141 = vpop.xlane.xlu0 %1140
  %1142 = vadd.xlane.f32.xlu0 %v1079
  %v1143 = vpop.xlane.xlu0 %1142
  %1144 = vadd.xlane.f32.xlu0 %v1081
  %v1145 = vpop.xlane.xlu0 %1144
  %1146 = vadd.xlane.f32.xlu0 %v1083
  %v1147 = vpop.xlane.xlu0 %1146
  %1148 = vadd.xlane.f32.xlu0 %v1085
  %v1149 = vpop.xlane.xlu0 %1148
  %1150 = vadd.xlane.f32.xlu0 %v1087
  %v1151 = vpop.xlane.xlu0 %1150
  %1152 = vadd.xlane.f32.xlu0 %v1089
  %v1153 = vpop.xlane.xlu0 %1152
  %1154 = vadd.xlane.f32.xlu0 %v1091
  %v1155 = vpop.xlane.xlu0 %1154
  %1156 = vadd.xlane.f32.xlu0 %v1093
  %v1157 = vpop.xlane.xlu0 %1156
  %1158 = vadd.xlane.f32.xlu0 %v1095
  %v1159 = vpop.xlane.xlu0 %1158
  %1160 = vadd.xlane.f32.xlu0 %v1097
  %v1161 = vpop.xlane.xlu0 %1160
  %1162 = vadd.xlane.f32.xlu0 %v1099
  %v1163 = vpop.xlane.xlu0 %1162
  %1164 = vadd.xlane.f32.xlu0 %v1101
  %v1165 = vpop.xlane.xlu0 %1164
  %1166 = vadd.xlane.f32.xlu0 %v1103
  %v1167 = vpop.xlane.xlu0 %1166
  %1168 = vadd.xlane.f32.xlu0 %v1105
  %v1169 = vpop.xlane.xlu0 %1168
  %1170 = vadd.xlane.f32.xlu0 %v1107
  %v1171 = vpop.xlane.xlu0 %1170
  %1172 = vadd.xlane.f32.xlu0 %v1109
  %v1173 = vpop.xlane.xlu0 %1172
  %1174 = vadd.xlane.f32.xlu0 %v1111
  %v1175 = vpop.xlane.xlu0 %1174
  %v1176 = vrcp.pop %v1113
  %v1177 = vrcp.pop %v1115
  %v1178 = vrcp.pop %v1117
  %v1179 = vrcp.pop %v1119
  %v1180 = vrcp.pop %v1121
  %v1181 = vrcp.pop %v1123
  %v1182 = vrcp.pop %v1125
  %v1183 = vrcp.pop %v1127
  %v1184 = vrcp.pop %v1129
  %v1185 = vrcp.pop %v1131
  %v1186 = vrcp.pop %v1133
  %v1187 = vrcp.pop %v1135
  %v1188 = vrcp.pop %v1137
  %v1189 = vrcp.pop %v1139
  %v1190 = vrcp.pop %v1141
  %v1191 = vrcp.pop %v1143
  %v1192 = vrcp.pop %v1145
  %v1193 = vrcp.pop %v1147
  %v1194 = vrcp.pop %v1149
  %v1195 = vrcp.pop %v1151
  %v1196 = vrcp.pop %v1153
  %v1197 = vrcp.pop %v1155
  %v1198 = vrcp.pop %v1157
  %v1199 = vrcp.pop %v1159
  %v1200 = vrcp.pop %v1161
  %v1201 = vrcp.pop %v1163
  %v1202 = vrcp.pop %v1165
  %v1203 = vrcp.pop %v1167
  %v1204 = vrcp.pop %v1169
  %v1205 = vrcp.pop %v1171
  %v1206 = vrcp.pop %v1173
  %v1207 = vrcp.pop %v1175
  %v1208 = vmul.f32 %v1049, %v1176
  %v1209 = vmul.f32 %v1051, %v1177
  %v1210 = vmul.f32 %v1053, %v1178
  %v1211 = vmul.f32 %v1055, %v1179
  %v1212 = vmul.f32 %v1057, %v1180
  %v1213 = vmul.f32 %v1059, %v1181
  %v1214 = vmul.f32 %v1061, %v1182
  %v1215 = vmul.f32 %v1063, %v1183
  %v1216 = vmul.f32 %v1065, %v1184
  %v1217 = vmul.f32 %v1067, %v1185
  %v1218 = vmul.f32 %v1069, %v1186
  %v1219 = vmul.f32 %v1071, %v1187
  %v1220 = vmul.f32 %v1073, %v1188
  %v1221 = vmul.f32 %v1075, %v1189
  %v1222 = vmul.f32 %v1077, %v1190
  %v1223 = vmul.f32 %v1079, %v1191
  %v1224 = vmul.f32 %v1081, %v1192
  %v1225 = vmul.f32 %v1083, %v1193
  %v1226 = vmul.f32 %v1085, %v1194
  %v1227 = vmul.f32 %v1087, %v1195
  %v1228 = vmul.f32 %v1089, %v1196
  %v1229 = vmul.f32 %v1091, %v1197
  %v1230 = vmul.f32 %v1093, %v1198
  %v1231 = vmul.f32 %v1095, %v1199
  %v1232 = vmul.f32 %v1097, %v1200
  %v1233 = vmul.f32 %v1099, %v1201
  %v1234 = vmul.f32 %v1101, %v1202
  %v1235 = vmul.f32 %v1103, %v1203
  %v1236 = vmul.f32 %v1105, %v1204
  %v1237 = vmul.f32 %v1107, %v1205
  %v1238 = vmul.f32 %v1109, %v1206
  %v1239 = vmul.f32 %v1111, %v1207
  %v1240 = vpack.c.bf16 %v1209, %v1208
  %v1241 = vpack.c.bf16 %v1211, %v1210
  %v1242 = vpack.c.bf16 %v1213, %v1212
  %v1243 = vpack.c.bf16 %v1215, %v1214
  %v1244 = vpack.c.bf16 %v1217, %v1216
  %v1245 = vpack.c.bf16 %v1219, %v1218
  %v1246 = vpack.c.bf16 %v1221, %v1220
  %v1247 = vpack.c.bf16 %v1223, %v1222
  %v1248 = vpack.c.bf16 %v1225, %v1224
  %v1249 = vpack.c.bf16 %v1227, %v1226
  %v1250 = vpack.c.bf16 %v1229, %v1228
  %v1251 = vpack.c.bf16 %v1231, %v1230
  %v1252 = vpack.c.bf16 %v1233, %v1232
  %v1253 = vpack.c.bf16 %v1235, %v1234
  %v1254 = vpack.c.bf16 %v1237, %v1236
  %v1255 = vpack.c.bf16 %v1239, %v1238
  %1256 = vxpose.xlu0.c.b16.start [1/8] %v1240, 128
  %1257 = vxpose.xlu0.c.b16.cont [2/8] %v1241, 128
  %1258 = vxpose.xlu0.c.b16.cont [3/8] %v1242, 128
  %1259 = vxpose.xlu0.c.b16.cont [4/8] %v1243, 128
  %1260 = vxpose.xlu0.c.b16.cont [5/8] %v1244, 128
  %1261 = vxpose.xlu0.c.b16.cont [6/8] %v1245, 128
  %1262 = vxpose.xlu0.c.b16.cont [7/8] %v1246, 128
  %1263 = vxpose.xlu0.c.b16.end [8/8] %v1247, 128
  %v1264 = vpop.trf.xlu0
  %v1265 = vpop.trf.xlu0
  %v1266 = vpop.trf.xlu0
  %v1267 = vpop.trf.xlu0
  %v1268 = vpop.trf.xlu0
  %v1269 = vpop.trf.xlu0
  %v1270 = vpop.trf.xlu0
  %v1271 = vpop.trf.xlu0
  %1272 = vxpose.xlu0.c.b16.start [1/8] %v1248, 128
  %1273 = vxpose.xlu0.c.b16.cont [2/8] %v1249, 128
  %1274 = vxpose.xlu0.c.b16.cont [3/8] %v1250, 128
  %1275 = vxpose.xlu0.c.b16.cont [4/8] %v1251, 128
  %1276 = vxpose.xlu0.c.b16.cont [5/8] %v1252, 128
  %1277 = vxpose.xlu0.c.b16.cont [6/8] %v1253, 128
  %1278 = vxpose.xlu0.c.b16.cont [7/8] %v1254, 128
  %1279 = vxpose.xlu0.c.b16.end [8/8] %v1255, 128
  %v1280 = vpop.trf.xlu0
  %v1281 = vpop.trf.xlu0
  %v1282 = vpop.trf.xlu0
  %v1283 = vpop.trf.xlu0
  %v1284 = vpop.trf.xlu0
  %v1285 = vpop.trf.xlu0
  %v1286 = vpop.trf.xlu0
  %v1287 = vpop.trf.xlu0
  %1304 = vrot.lane.b32.xlu0 %v614, 112
  %v1305 = vpop.permute.xlu0 %1304
  %1306 = vrot.lane.b32.xlu0 %v615, 112
  %v1307 = vpop.permute.xlu0 %1306
  %1308 = vrot.lane.b32.xlu0 %v616, 112
  %v1309 = vpop.permute.xlu0 %1308
  %1310 = vrot.lane.b32.xlu0 %v617, 112
  %v1311 = vpop.permute.xlu0 %1310
  %1312 = vrot.lane.b32.xlu0 %v618, 112
  %v1313 = vpop.permute.xlu0 %1312
  %1314 = vrot.lane.b32.xlu0 %v619, 112
  %v1315 = vpop.permute.xlu0 %1314
  %1316 = vrot.lane.b32.xlu0 %v620, 112
  %v1317 = vpop.permute.xlu0 %1316
  %1318 = vrot.lane.b32.xlu0 %v621, 112
  %v1319 = vpop.permute.xlu0 %1318
  %1320 = vrot.lane.b32.xlu0 %v622, 112
  %v1321 = vpop.permute.xlu0 %1320
  %1322 = vrot.lane.b32.xlu0 %v623, 112
  %v1323 = vpop.permute.xlu0 %1322
  %1324 = vrot.lane.b32.xlu0 %v624, 112
  %v1325 = vpop.permute.xlu0 %1324
  %1326 = vrot.lane.b32.xlu0 %v625, 112
  %v1327 = vpop.permute.xlu0 %1326
  %1328 = vrot.lane.b32.xlu0 %v626, 112
  %v1329 = vpop.permute.xlu0 %1328
  %1330 = vrot.lane.b32.xlu0 %v627, 112
  %v1331 = vpop.permute.xlu0 %1330
  %1332 = vrot.lane.b32.xlu0 %v628, 112
  %v1333 = vpop.permute.xlu0 %1332
  %1334 = vrot.lane.b32.xlu0 %v629, 112
  %v1335 = vpop.permute.xlu0 %1334
  %1352 = vmatprep.subr.bf16.mxu0 0
  %1353 = vmatpush1.bf16.msra.mxu0 %v1305
  %1354 = vmatprep.subr.bf16.mxu0 0
  %1355 = vmatpush1.bf16.msra.mxu0 %v1307
  %1356 = vmatprep.subr.bf16.mxu0 0
  %1357 = vmatpush1.bf16.msra.mxu0 %v1309
  %1358 = vmatprep.subr.bf16.mxu0 0
  %1359 = vmatpush1.bf16.msra.mxu0 %v1311
  %1360 = vmatprep.subr.bf16.mxu0 0
  %1361 = vmatpush1.bf16.msra.mxu0 %v1313
  %1362 = vmatprep.subr.bf16.mxu0 0
  %1363 = vmatpush1.bf16.msra.mxu0 %v1315
  %1364 = vmatprep.subr.bf16.mxu0 0
  %1365 = vmatpush1.bf16.msra.mxu0 %v1317
  %1366 = vmatprep.subr.bf16.mxu0 0
  %1367 = vmatpush1.bf16.msra.mxu0 %v1319
  %1368 = vmatprep.subr.bf16.mxu0 0
  %1369 = vmatpush1.bf16.msra.mxu0 %v1321
  %1370 = vmatprep.subr.bf16.mxu0 0
  %1371 = vmatpush1.bf16.msra.mxu0 %v1323
  %1372 = vmatprep.subr.bf16.mxu0 0
  %1373 = vmatpush1.bf16.msra.mxu0 %v1325
  %1374 = vmatprep.subr.bf16.mxu0 0
  %1375 = vmatpush1.bf16.msra.mxu0 %v1327
  %1376 = vmatprep.subr.bf16.mxu0 0
  %1377 = vmatpush1.bf16.msra.mxu0 %v1329
  %1378 = vmatprep.subr.bf16.mxu0 0
  %1379 = vmatpush1.bf16.msra.mxu0 %v1331
  %1380 = vmatprep.subr.bf16.mxu0 0
  %1381 = vmatpush1.bf16.msra.mxu0 %v1333
  %1382 = vmatprep.subr.bf16.mxu0 0
  %1383 = vmatpush1.bf16.msra.mxu0 %v1335
  %1384 = vmatprep.mubr.bf16.mxu0 %v1280
  %1385 = vmatmul.mubr.bf16.gmra.mrb[0].mxu0 %v1264
  %v1386 = vpop.f32.mrb[0].mxu0
  %v1387 = vadd.f32 0.0, %v1386
  %v1388 = vpop.f32.mrb[0].mxu0
  %v1389 = vpop.f32.mrb[0].mxu0
  %v1390 = vadd.f32 0.0, %v1389
  %v1391 = vpop.f32.mrb[0].mxu0
  %1392 = vmatprep.mubr.bf16.mxu0 %v1281
  %1393 = vmatmul.mubr.bf16.gmra.mrb[0].mxu0 %v1265
  %v1394 = vpop.f32.mrb[0].mxu0
  %v1395 = vadd.f32 0.0, %v1394
  %v1396 = vpop.f32.mrb[0].mxu0
  %v1397 = vpop.f32.mrb[0].mxu0
  %v1398 = vadd.f32 0.0, %v1397
  %v1399 = vpop.f32.mrb[0].mxu0
  %1400 = vmatprep.mubr.bf16.mxu0 %v1282
  %1401 = vmatmul.mubr.bf16.gmra.mrb[0].mxu0 %v1266
  %v1402 = vpop.f32.mrb[0].mxu0
  %v1403 = vadd.f32 0.0, %v1402
  %v1404 = vpop.f32.mrb[0].mxu0
  %v1405 = vpop.f32.mrb[0].mxu0
  %v1406 = vadd.f32 0.0, %v1405
  %v1407 = vpop.f32.mrb[0].mxu0
  %1408 = vmatprep.mubr.bf16.mxu0 %v1283
  %1409 = vmatmul.mubr.bf16.gmra.mrb[0].mxu0 %v1267
  %v1410 = vpop.f32.mrb[0].mxu0
  %v1411 = vadd.f32 0.0, %v1410
  %v1412 = vpop.f32.mrb[0].mxu0
  %v1413 = vpop.f32.mrb[0].mxu0
  %v1414 = vadd.f32 0.0, %v1413
  %v1415 = vpop.f32.mrb[0].mxu0
  %1416 = vmatprep.mubr.bf16.mxu0 %v1284
  %1417 = vmatmul.mubr.bf16.gmra.mrb[0].mxu0 %v1268
  %v1418 = vpop.f32.mrb[0].mxu0
  %v1419 = vadd.f32 0.0, %v1418
  %v1420 = vpop.f32.mrb[0].mxu0
  %v1421 = vpop.f32.mrb[0].mxu0
  %v1422 = vadd.f32 0.0, %v1421
  %v1423 = vpop.f32.mrb[0].mxu0
  %1424 = vmatprep.mubr.bf16.mxu0 %v1285
  %1425 = vmatmul.mubr.bf16.gmra.mrb[0].mxu0 %v1269
  %v1426 = vpop.f32.mrb[0].mxu0
  %v1427 = vadd.f32 0.0, %v1426
  %v1428 = vpop.f32.mrb[0].mxu0
  %v1429 = vpop.f32.mrb[0].mxu0
  %v1430 = vadd.f32 0.0, %v1429
  %v1431 = vpop.f32.mrb[0].mxu0
  %1432 = vmatprep.mubr.bf16.mxu0 %v1286
  %1433 = vmatmul.mubr.bf16.gmra.mrb[0].mxu0 %v1270
  %v1434 = vpop.f32.mrb[0].mxu0
  %v1435 = vadd.f32 0.0, %v1434
  %v1436 = vpop.f32.mrb[0].mxu0
  %v1437 = vpop.f32.mrb[0].mxu0
  %v1438 = vadd.f32 0.0, %v1437
  %v1439 = vpop.f32.mrb[0].mxu0
  %1440 = vmatprep.mubr.bf16.mxu0 %v1287
  %1441 = vmatmul.mubr.bf16.gmra.mrb[0].mxu0 %v1271
  %v1442 = vpop.f32.mrb[0].mxu0
  %v1443 = vadd.f32 0.0, %v1442
  %v1444 = vpop.f32.mrb[0].mxu0
  %v1445 = vpop.f32.mrb[0].mxu0
  %v1446 = vadd.f32 0.0, %v1445
  %v1447 = vpop.f32.mrb[0].mxu0
  %1448 = vdwg.mxu0
  %v1449 = vpack.c.bf16 %v1390, %v1387
  %v1450 = vpack.c.bf16 %v1398, %v1395
  %v1451 = vpack.c.bf16 %v1406, %v1403
  %v1452 = vpack.c.bf16 %v1414, %v1411
  %v1453 = vpack.c.bf16 %v1422, %v1419
  %v1454 = vpack.c.bf16 %v1430, %v1427
  %v1455 = vpack.c.bf16 %v1438, %v1435
  %v1456 = vpack.c.bf16 %v1446, %v1443
  %v1457 = vld [vmem:[%s6] sm:$0xf]
  %v1458 = vld [vmem:[%s6 + $0x4] sm:$0xf]
  %v1459 = vld [vmem:[%s6 + $0x8] sm:$0xf]
  %v1460 = vld [vmem:[%s6 + $0xc] sm:$0xf]
  %v1461 = vld [vmem:[%s7] sm:$0x1]
  %v1463 = vlaneseq
  %v1464 = vshrl.u32 %v1463, 7
  %v1465 = vsub.s32 0, %v1464
  %v1466 = vrot.slane %v1461, %v1465
  %v1472 = vunpack.c.l.b16 %v1457
  %v1473 = vunpack.c.l.b16 %v1458
  %v1474 = vunpack.c.l.b16 %v1459
  %v1475 = vunpack.c.l.b16 %v1460
  %v1476 = vpack.c.b16 %v1473, %v1472
  %v1477 = vpack.c.b16 %v1475, %v1474
  %v1481 = vsel %vm92, %v1449, 0
  %v1484 = vsel %vm92, %v1450, 0
  %v1487 = vsel %vm92, %v1451, 0
  %v1490 = vsel %vm92, %v1452, 0
  %v1493 = vsel %vm92, %v1453, 0
  %v1496 = vsel %vm92, %v1454, 0
  %v1499 = vsel %vm92, %v1455, 0
  %v1502 = vsel %vm92, %v1456, 0
  %1504 = vmatprep.subr.bf16.mxu0 0
  %1505 = vmatpush1.bf16.msra.mxu0 %v1476
  %1506 = vmatprep.subr.bf16.mxu0 0
  %1507 = vmatpush1.bf16.msra.mxu0 %v1477
  %1508 = vmatprep.subr.bf16.mxu0 0
  %1509 = vmatpush1.bf16.msra.mxu0 0
  %1510 = vmatprep.subr.bf16.mxu0 0
  %1511 = vmatpush1.bf16.msra.mxu0 0
  %1512 = vmatprep.subr.bf16.mxu0 0
  %1513 = vmatpush1.bf16.msra.mxu0 0
  %1514 = vmatprep.subr.bf16.mxu0 0
  %1515 = vmatpush1.bf16.msra.mxu0 0
  %1516 = vmatprep.subr.bf16.mxu0 0
  %1517 = vmatpush1.bf16.msra.mxu0 0
  %1518 = vmatprep.subr.bf16.mxu0 0
  %1519 = vmatpush1.bf16.msra.mxu0 0
  %1520 = vmatprep.subr.bf16.mxu0 0
  %1521 = vmatpush1.bf16.msra.mxu0 0
  %1522 = vmatprep.subr.bf16.mxu0 0
  %1523 = vmatpush1.bf16.msra.mxu0 0
  %1524 = vmatprep.subr.bf16.mxu0 0
  %1525 = vmatpush1.bf16.msra.mxu0 0
  %1526 = vmatprep.subr.bf16.mxu0 0
  %1527 = vmatpush1.bf16.msra.mxu0 0
  %1528 = vmatprep.subr.bf16.mxu0 0
  %1529 = vmatpush1.bf16.msra.mxu0 0
  %1530 = vmatprep.subr.bf16.mxu0 0
  %1531 = vmatpush1.bf16.msra.mxu0 0
  %1532 = vmatprep.subr.bf16.mxu0 0
  %1533 = vmatpush1.bf16.msra.mxu0 0
  %1534 = vmatprep.subr.bf16.mxu0 0
  %1535 = vmatpush1.bf16.msra.mxu0 0
  %1536 = vmatprep.mubr.bf16.mxu0 0
  %1537 = vmatmul.mubr.bf16.gmra.mrb[0].mxu0 %v1481
  %v1538 = vpop.f32.mrb[0].mxu0
  %v1539 = vadd.f32 %v1466, %v1538
  %v1540 = vpop.f32.mrb[0].mxu0
  %v1541 = vpop.f32.mrb[0].mxu0
  %v1542 = vadd.f32 %v1466, %v1541
  %v1543 = vpop.f32.mrb[0].mxu0
  %1544 = vmatprep.mubr.bf16.mxu0 0
  %1545 = vmatmul.mubr.bf16.gmra.mrb[0].mxu0 %v1484
  %v1546 = vpop.f32.mrb[0].mxu0
  %v1547 = vadd.f32 %v1466, %v1546
  %v1548 = vpop.f32.mrb[0].mxu0
  %v1549 = vpop.f32.mrb[0].mxu0
  %v1550 = vadd.f32 %v1466, %v1549
  %v1551 = vpop.f32.mrb[0].mxu0
  %1552 = vmatprep.mubr.bf16.mxu0 0
  %1553 = vmatmul.mubr.bf16.gmra.mrb[0].mxu0 %v1487
  %v1554 = vpop.f32.mrb[0].mxu0
  %v1555 = vadd.f32 %v1466, %v1554
  %v1556 = vpop.f32.mrb[0].mxu0
  %v1557 = vpop.f32.mrb[0].mxu0
  %v1558 = vadd.f32 %v1466, %v1557
  %v1559 = vpop.f32.mrb[0].mxu0
  %1560 = vmatprep.mubr.bf16.mxu0 0
  %1561 = vmatmul.mubr.bf16.gmra.mrb[0].mxu0 %v1490
  %v1562 = vpop.f32.mrb[0].mxu0
  %v1563 = vadd.f32 %v1466, %v1562
  %v1564 = vpop.f32.mrb[0].mxu0
  %v1565 = vpop.f32.mrb[0].mxu0
  %v1566 = vadd.f32 %v1466, %v1565
  %v1567 = vpop.f32.mrb[0].mxu0
  %1568 = vmatprep.mubr.bf16.mxu0 0
  %1569 = vmatmul.mubr.bf16.gmra.mrb[0].mxu0 %v1493
  %v1570 = vpop.f32.mrb[0].mxu0
  %v1571 = vadd.f32 %v1466, %v1570
  %v1572 = vpop.f32.mrb[0].mxu0
  %v1573 = vpop.f32.mrb[0].mxu0
  %v1574 = vadd.f32 %v1466, %v1573
  %v1575 = vpop.f32.mrb[0].mxu0
  %1576 = vmatprep.mubr.bf16.mxu0 0
  %1577 = vmatmul.mubr.bf16.gmra.mrb[0].mxu0 %v1496
  %v1578 = vpop.f32.mrb[0].mxu0
  %v1579 = vadd.f32 %v1466, %v1578
  %v1580 = vpop.f32.mrb[0].mxu0
  %v1581 = vpop.f32.mrb[0].mxu0
  %v1582 = vadd.f32 %v1466, %v1581
  %v1583 = vpop.f32.mrb[0].mxu0
  %1584 = vmatprep.mubr.bf16.mxu0 0
  %1585 = vmatmul.mubr.bf16.gmra.mrb[0].mxu0 %v1499
  %v1586 = vpop.f32.mrb[0].mxu0
  %v1587 = vadd.f32 %v1466, %v1586
  %v1588 = vpop.f32.mrb[0].mxu0
  %v1589 = vpop.f32.mrb[0].mxu0
  %v1590 = vadd.f32 %v1466, %v1589
  %v1591 = vpop.f32.mrb[0].mxu0
  %1592 = vmatprep.mubr.bf16.mxu0 0
  %1593 = vmatmul.mubr.bf16.gmra.mrb[0].mxu0 %v1502
  %v1594 = vpop.f32.mrb[0].mxu0
  %v1595 = vadd.f32 %v1466, %v1594
  %v1596 = vpop.f32.mrb[0].mxu0
  %v1597 = vpop.f32.mrb[0].mxu0
  %v1598 = vadd.f32 %v1466, %v1597
  %v1599 = vpop.f32.mrb[0].mxu0
  %1600 = vdwg.mxu0
  %v1601 = vmin.f32 %v1539, 20.0
  %v1602 = vmin.f32 %v1542, 20.0
  %v1603 = vmin.f32 %v1547, 20.0
  %v1604 = vmin.f32 %v1550, 20.0
  %v1605 = vmin.f32 %v1555, 20.0
  %v1606 = vmin.f32 %v1558, 20.0
  %v1607 = vmin.f32 %v1563, 20.0
  %v1608 = vmin.f32 %v1566, 20.0
  %v1609 = vmin.f32 %v1571, 20.0
  %v1610 = vmin.f32 %v1574, 20.0
  %v1611 = vmin.f32 %v1579, 20.0
  %v1612 = vmin.f32 %v1582, 20.0
  %v1613 = vmin.f32 %v1587, 20.0
  %v1614 = vmin.f32 %v1590, 20.0
  %v1615 = vmin.f32 %v1595, 20.0
  %v1616 = vmin.f32 %v1598, 20.0
  %v1617 = vmul.f32 %v1601, 1.442695
  %v1618 = vpow.pop %v1617
  %v1619 = vmul.f32 %v1602, 1.442695
  %v1620 = vpow.pop %v1619
  %v1621 = vmul.f32 %v1603, 1.442695
  %v1622 = vpow.pop %v1621
  %v1623 = vmul.f32 %v1604, 1.442695
  %v1624 = vpow.pop %v1623
  %v1625 = vmul.f32 %v1605, 1.442695
  %v1626 = vpow.pop %v1625
  %v1627 = vmul.f32 %v1606, 1.442695
  %v1628 = vpow.pop %v1627
  %v1629 = vmul.f32 %v1607, 1.442695
  %v1630 = vpow.pop %v1629
  %v1631 = vmul.f32 %v1608, 1.442695
  %v1632 = vpow.pop %v1631
  %v1633 = vmul.f32 %v1609, 1.442695
  %v1634 = vpow.pop %v1633
  %v1635 = vmul.f32 %v1610, 1.442695
  %v1636 = vpow.pop %v1635
  %v1637 = vmul.f32 %v1611, 1.442695
  %v1638 = vpow.pop %v1637
  %v1639 = vmul.f32 %v1612, 1.442695
  %v1640 = vpow.pop %v1639
  %v1641 = vmul.f32 %v1613, 1.442695
  %v1642 = vpow.pop %v1641
  %v1643 = vmul.f32 %v1614, 1.442695
  %v1644 = vpow.pop %v1643
  %v1645 = vmul.f32 %v1615, 1.442695
  %v1646 = vpow.pop %v1645
  %v1647 = vmul.f32 %v1616, 1.442695
  %v1648 = vpow.pop %v1647
  %v1649 = vadd.f32 %v1618, 2.0
  %v1650 = vadd.f32 %v1620, 2.0
  %v1651 = vadd.f32 %v1622, 2.0
  %v1652 = vadd.f32 %v1624, 2.0
  %v1653 = vadd.f32 %v1626, 2.0
  %v1654 = vadd.f32 %v1628, 2.0
  %v1655 = vadd.f32 %v1630, 2.0
  %v1656 = vadd.f32 %v1632, 2.0
  %v1657 = vadd.f32 %v1634, 2.0
  %v1658 = vadd.f32 %v1636, 2.0
  %v1659 = vadd.f32 %v1638, 2.0
  %v1660 = vadd.f32 %v1640, 2.0
  %v1661 = vadd.f32 %v1642, 2.0
  %v1662 = vadd.f32 %v1644, 2.0
  %v1663 = vadd.f32 %v1646, 2.0
  %v1664 = vadd.f32 %v1648, 2.0
  %v1665 = vmul.f32 %v1618, %v1649
  %v1666 = vmul.f32 %v1620, %v1650
  %v1667 = vmul.f32 %v1622, %v1651
  %v1668 = vmul.f32 %v1624, %v1652
  %v1669 = vmul.f32 %v1626, %v1653
  %v1670 = vmul.f32 %v1628, %v1654
  %v1671 = vmul.f32 %v1630, %v1655
  %v1672 = vmul.f32 %v1632, %v1656
  %v1673 = vmul.f32 %v1634, %v1657
  %v1674 = vmul.f32 %v1636, %v1658
  %v1675 = vmul.f32 %v1638, %v1659
  %v1676 = vmul.f32 %v1640, %v1660
  %v1677 = vmul.f32 %v1642, %v1661
  %v1678 = vmul.f32 %v1644, %v1662
  %v1679 = vmul.f32 %v1646, %v1663
  %v1680 = vmul.f32 %v1648, %v1664
  %vm1681 = vcmp.gt.f32.partialorder %v1539, 20.0
  %vm1682 = vcmp.gt.f32.partialorder %v1542, 20.0
  %vm1683 = vcmp.gt.f32.partialorder %v1547, 20.0
  %vm1684 = vcmp.gt.f32.partialorder %v1550, 20.0
  %vm1685 = vcmp.gt.f32.partialorder %v1555, 20.0
  %vm1686 = vcmp.gt.f32.partialorder %v1558, 20.0
  %vm1687 = vcmp.gt.f32.partialorder %v1563, 20.0
  %vm1688 = vcmp.gt.f32.partialorder %v1566, 20.0
  %vm1689 = vcmp.gt.f32.partialorder %v1571, 20.0
  %vm1690 = vcmp.gt.f32.partialorder %v1574, 20.0
  %vm1691 = vcmp.gt.f32.partialorder %v1579, 20.0
  %vm1692 = vcmp.gt.f32.partialorder %v1582, 20.0
  %vm1693 = vcmp.gt.f32.partialorder %v1587, 20.0
  %vm1694 = vcmp.gt.f32.partialorder %v1590, 20.0
  %vm1695 = vcmp.gt.f32.partialorder %v1595, 20.0
  %vm1696 = vcmp.gt.f32.partialorder %v1598, 20.0
  %v1697 = vadd.f32 %v1665, 2.0
  %v1698 = vadd.f32 %v1666, 2.0
  %v1699 = vadd.f32 %v1667, 2.0
  %v1700 = vadd.f32 %v1668, 2.0
  %v1701 = vadd.f32 %v1669, 2.0
  %v1702 = vadd.f32 %v1670, 2.0
  %v1703 = vadd.f32 %v1671, 2.0
  %v1704 = vadd.f32 %v1672, 2.0
  %v1705 = vadd.f32 %v1673, 2.0
  %v1706 = vadd.f32 %v1674, 2.0
  %v1707 = vadd.f32 %v1675, 2.0
  %v1708 = vadd.f32 %v1676, 2.0
  %v1709 = vadd.f32 %v1677, 2.0
  %v1710 = vadd.f32 %v1678, 2.0
  %v1711 = vadd.f32 %v1679, 2.0
  %v1712 = vadd.f32 %v1680, 2.0
  %v1713 = vrcp.pop %v1697
  %v1714 = vrcp.pop %v1698
  %v1715 = vrcp.pop %v1699
  %v1716 = vrcp.pop %v1700
  %v1717 = vrcp.pop %v1701
  %v1718 = vrcp.pop %v1702
  %v1719 = vrcp.pop %v1703
  %v1720 = vrcp.pop %v1704
  %v1721 = vrcp.pop %v1705
  %v1722 = vrcp.pop %v1706
  %v1723 = vrcp.pop %v1707
  %v1724 = vrcp.pop %v1708
  %v1725 = vrcp.pop %v1709
  %v1726 = vrcp.pop %v1710
  %v1727 = vrcp.pop %v1711
  %v1728 = vrcp.pop %v1712
  %v1729 = vmul.f32 %v1665, %v1713
  %v1730 = vmul.f32 %v1666, %v1714
  %v1731 = vmul.f32 %v1667, %v1715
  %v1732 = vmul.f32 %v1668, %v1716
  %v1733 = vmul.f32 %v1669, %v1717
  %v1734 = vmul.f32 %v1670, %v1718
  %v1735 = vmul.f32 %v1671, %v1719
  %v1736 = vmul.f32 %v1672, %v1720
  %v1737 = vmul.f32 %v1673, %v1721
  %v1738 = vmul.f32 %v1674, %v1722
  %v1739 = vmul.f32 %v1675, %v1723
  %v1740 = vmul.f32 %v1676, %v1724
  %v1741 = vmul.f32 %v1677, %v1725
  %v1742 = vmul.f32 %v1678, %v1726
  %v1743 = vmul.f32 %v1679, %v1727
  %v1744 = vmul.f32 %v1680, %v1728
  %v1745 = vsel %vm1681, 1.0, %v1729
  %v1746 = vsel %vm1682, 1.0, %v1730
  %v1747 = vsel %vm1683, 1.0, %v1731
  %v1748 = vsel %vm1684, 1.0, %v1732
  %v1749 = vsel %vm1685, 1.0, %v1733
  %v1750 = vsel %vm1686, 1.0, %v1734
  %v1751 = vsel %vm1687, 1.0, %v1735
  %v1752 = vsel %vm1688, 1.0, %v1736
  %v1753 = vsel %vm1689, 1.0, %v1737
  %v1754 = vsel %vm1690, 1.0, %v1738
  %v1755 = vsel %vm1691, 1.0, %v1739
  %v1756 = vsel %vm1692, 1.0, %v1740
  %v1757 = vsel %vm1693, 1.0, %v1741
  %v1758 = vsel %vm1694, 1.0, %v1742
  %v1759 = vsel %vm1695, 1.0, %v1743
  %v1760 = vsel %vm1696, 1.0, %v1744
  %v1761 = vmul.f32 %v1539, %v1745
  %v1762 = vmul.f32 %v1542, %v1746
  %v1763 = vmul.f32 %v1547, %v1747
  %v1764 = vmul.f32 %v1550, %v1748
  %v1765 = vmul.f32 %v1555, %v1749
  %v1766 = vmul.f32 %v1558, %v1750
  %v1767 = vmul.f32 %v1563, %v1751
  %v1768 = vmul.f32 %v1566, %v1752
  %v1769 = vmul.f32 %v1571, %v1753
  %v1770 = vmul.f32 %v1574, %v1754
  %v1771 = vmul.f32 %v1579, %v1755
  %v1772 = vmul.f32 %v1582, %v1756
  %v1773 = vmul.f32 %v1587, %v1757
  %v1774 = vmul.f32 %v1590, %v1758
  %v1775 = vmul.f32 %v1595, %v1759
  %v1776 = vmul.f32 %v1598, %v1760
  %v1777 = vpack.c.bf16 %v1762, %v1761
  %v1778 = vpack.c.bf16 %v1764, %v1763
  %v1779 = vpack.c.bf16 %v1766, %v1765
  %v1780 = vpack.c.bf16 %v1768, %v1767
  %v1781 = vpack.c.bf16 %v1770, %v1769
  %v1782 = vpack.c.bf16 %v1772, %v1771
  %v1783 = vpack.c.bf16 %v1774, %v1773
  %v1784 = vpack.c.bf16 %v1776, %v1775
  %v1785 = vld [vmem:[%s8] sm:$0xf]
  %v1786 = vld [vmem:[%s8 + $0x4] sm:$0xf]
  %v1787 = vld [vmem:[%s8 + $0x8] sm:$0xf]
  %v1788 = vld [vmem:[%s8 + $0xc] sm:$0xf]
  %v1789 = vld [vmem:[%s9] sm:$0x1]
  %v1791 = vlaneseq
  %v1792 = vshrl.u32 %v1791, 7
  %v1793 = vsub.s32 0, %v1792
  %v1794 = vrot.slane %v1789, %v1793
  %v1800 = vunpack.c.l.b16 %v1785
  %v1801 = vunpack.c.l.b16 %v1786
  %v1802 = vunpack.c.l.b16 %v1787
  %v1803 = vunpack.c.l.b16 %v1788
  %v1804 = vpack.c.b16 %v1801, %v1800
  %v1805 = vpack.c.b16 %v1803, %v1802
  %v1809 = vsel %vm92, %v1777, 0
  %v1812 = vsel %vm92, %v1778, 0
  %v1815 = vsel %vm92, %v1779, 0
  %v1818 = vsel %vm92, %v1780, 0
  %v1821 = vsel %vm92, %v1781, 0
  %v1824 = vsel %vm92, %v1782, 0
  %v1827 = vsel %vm92, %v1783, 0
  %v1830 = vsel %vm92, %v1784, 0
  %1832 = vmatprep.subr.bf16.mxu0 0
  %1833 = vmatpush1.bf16.msra.mxu0 %v1804
  %1834 = vmatprep.subr.bf16.mxu0 0
  %1835 = vmatpush1.bf16.msra.mxu0 %v1805
  %1836 = vmatprep.subr.bf16.mxu0 0
  %1837 = vmatpush1.bf16.msra.mxu0 0
  %1838 = vmatprep.subr.bf16.mxu0 0
  %1839 = vmatpush1.bf16.msra.mxu0 0
  %1840 = vmatprep.subr.bf16.mxu0 0
  %1841 = vmatpush1.bf16.msra.mxu0 0
  %1842 = vmatprep.subr.bf16.mxu0 0
  %1843 = vmatpush1.bf16.msra.mxu0 0
  %1844 = vmatprep.subr.bf16.mxu0 0
  %1845 = vmatpush1.bf16.msra.mxu0 0
  %1846 = vmatprep.subr.bf16.mxu0 0
  %1847 = vmatpush1.bf16.msra.mxu0 0
  %1848 = vmatprep.subr.bf16.mxu0 0
  %1849 = vmatpush1.bf16.msra.mxu0 0
  %1850 = vmatprep.subr.bf16.mxu0 0
  %1851 = vmatpush1.bf16.msra.mxu0 0
  %1852 = vmatprep.subr.bf16.mxu0 0
  %1853 = vmatpush1.bf16.msra.mxu0 0
  %1854 = vmatprep.subr.bf16.mxu0 0
  %1855 = vmatpush1.bf16.msra.mxu0 0
  %1856 = vmatprep.subr.bf16.mxu0 0
  %1857 = vmatpush1.bf16.msra.mxu0 0
  %1858 = vmatprep.subr.bf16.mxu0 0
  %1859 = vmatpush1.bf16.msra.mxu0 0
  %1860 = vmatprep.subr.bf16.mxu0 0
  %1861 = vmatpush1.bf16.msra.mxu0 0
  %1862 = vmatprep.subr.bf16.mxu0 0
  %1863 = vmatpush1.bf16.msra.mxu0 0
  %1864 = vmatprep.mubr.bf16.mxu0 0
  %1865 = vmatmul.mubr.bf16.gmra.mrb[0].mxu0 %v1809
  %v1866 = vpop.f32.mrb[0].mxu0
  %v1867 = vadd.f32 %v1794, %v1866
  %v1868 = vpop.f32.mrb[0].mxu0
  %v1869 = vpop.f32.mrb[0].mxu0
  %v1870 = vadd.f32 %v1794, %v1869
  %v1871 = vpop.f32.mrb[0].mxu0
  %1872 = vmatprep.mubr.bf16.mxu0 0
  %1873 = vmatmul.mubr.bf16.gmra.mrb[0].mxu0 %v1812
  %v1874 = vpop.f32.mrb[0].mxu0
  %v1875 = vadd.f32 %v1794, %v1874
  %v1876 = vpop.f32.mrb[0].mxu0
  %v1877 = vpop.f32.mrb[0].mxu0
  %v1878 = vadd.f32 %v1794, %v1877
  %v1879 = vpop.f32.mrb[0].mxu0
  %1880 = vmatprep.mubr.bf16.mxu0 0
  %1881 = vmatmul.mubr.bf16.gmra.mrb[0].mxu0 %v1815
  %v1882 = vpop.f32.mrb[0].mxu0
  %v1883 = vadd.f32 %v1794, %v1882
  %v1884 = vpop.f32.mrb[0].mxu0
  %v1885 = vpop.f32.mrb[0].mxu0
  %v1886 = vadd.f32 %v1794, %v1885
  %v1887 = vpop.f32.mrb[0].mxu0
  %1888 = vmatprep.mubr.bf16.mxu0 0
  %1889 = vmatmul.mubr.bf16.gmra.mrb[0].mxu0 %v1818
  %v1890 = vpop.f32.mrb[0].mxu0
  %v1891 = vadd.f32 %v1794, %v1890
  %v1892 = vpop.f32.mrb[0].mxu0
  %v1893 = vpop.f32.mrb[0].mxu0
  %v1894 = vadd.f32 %v1794, %v1893
  %v1895 = vpop.f32.mrb[0].mxu0
  %1896 = vmatprep.mubr.bf16.mxu0 0
  %1897 = vmatmul.mubr.bf16.gmra.mrb[0].mxu0 %v1821
  %v1898 = vpop.f32.mrb[0].mxu0
  %v1899 = vadd.f32 %v1794, %v1898
  %v1900 = vpop.f32.mrb[0].mxu0
  %v1901 = vpop.f32.mrb[0].mxu0
  %v1902 = vadd.f32 %v1794, %v1901
  %v1903 = vpop.f32.mrb[0].mxu0
  %1904 = vmatprep.mubr.bf16.mxu0 0
  %1905 = vmatmul.mubr.bf16.gmra.mrb[0].mxu0 %v1824
  %v1906 = vpop.f32.mrb[0].mxu0
  %v1907 = vadd.f32 %v1794, %v1906
  %v1908 = vpop.f32.mrb[0].mxu0
  %v1909 = vpop.f32.mrb[0].mxu0
  %v1910 = vadd.f32 %v1794, %v1909
  %v1911 = vpop.f32.mrb[0].mxu0
  %1912 = vmatprep.mubr.bf16.mxu0 0
  %1913 = vmatmul.mubr.bf16.gmra.mrb[0].mxu0 %v1827
  %v1914 = vpop.f32.mrb[0].mxu0
  %v1915 = vadd.f32 %v1794, %v1914
  %v1916 = vpop.f32.mrb[0].mxu0
  %v1917 = vpop.f32.mrb[0].mxu0
  %v1918 = vadd.f32 %v1794, %v1917
  %v1919 = vpop.f32.mrb[0].mxu0
  %1920 = vmatprep.mubr.bf16.mxu0 0
  %1921 = vmatmul.mubr.bf16.gmra.mrb[0].mxu0 %v1830
  %v1922 = vpop.f32.mrb[0].mxu0
  %v1923 = vadd.f32 %v1794, %v1922
  %v1924 = vpop.f32.mrb[0].mxu0
  %v1925 = vpop.f32.mrb[0].mxu0
  %v1926 = vadd.f32 %v1794, %v1925
  %v1927 = vpop.f32.mrb[0].mxu0
  %1928 = vdwg.mxu0
  %v1929 = vadd.f32 %v1867, %v36
  %v1930 = vadd.f32 %v1870, %v37
  %v1931 = vadd.f32 %v1875, %v38
  %v1932 = vadd.f32 %v1878, %v39
  %v1933 = vadd.f32 %v1883, %v40
  %v1934 = vadd.f32 %v1886, %v41
  %v1935 = vadd.f32 %v1891, %v42
  %v1936 = vadd.f32 %v1894, %v43
  %v1937 = vadd.f32 %v1899, %v44
  %v1938 = vadd.f32 %v1902, %v45
  %v1939 = vadd.f32 %v1907, %v46
  %v1940 = vadd.f32 %v1910, %v47
  %v1941 = vadd.f32 %v1915, %v48
  %v1942 = vadd.f32 %v1918, %v49
  %v1943 = vadd.f32 %v1923, %v50
  %v1944 = vadd.f32 %v1926, %v51
  %1945 = vst.msk [vmem:[%s10] sm:$0xff] %vm92, %v1929
  %1946 = vst.msk [vmem:[%s10 + $0x8] sm:$0xff] %vm92, %v1930
  %1947 = vst.msk [vmem:[%s10 + $0x10] sm:$0xff] %vm92, %v1931
  %1948 = vst.msk [vmem:[%s10 + $0x18] sm:$0xff] %vm92, %v1932
  %1949 = vst.msk [vmem:[%s10 + $0x20] sm:$0xff] %vm92, %v1933
  %1950 = vst.msk [vmem:[%s10 + $0x28] sm:$0xff] %vm92, %v1934
  %1951 = vst.msk [vmem:[%s10 + $0x30] sm:$0xff] %vm92, %v1935
  %1952 = vst.msk [vmem:[%s10 + $0x38] sm:$0xff] %vm92, %v1936
  %1953 = vst.msk [vmem:[%s10 + $0x40] sm:$0xff] %vm92, %v1937
  %1954 = vst.msk [vmem:[%s10 + $0x48] sm:$0xff] %vm92, %v1938
  %1955 = vst.msk [vmem:[%s10 + $0x50] sm:$0xff] %vm92, %v1939
  %1956 = vst.msk [vmem:[%s10 + $0x58] sm:$0xff] %vm92, %v1940
  %1957 = vst.msk [vmem:[%s10 + $0x60] sm:$0xff] %vm92, %v1941
  %1958 = vst.msk [vmem:[%s10 + $0x68] sm:$0xff] %vm92, %v1942
  %1959 = vst.msk [vmem:[%s10 + $0x70] sm:$0xff] %vm92, %v1943
  %1960 = vst.msk [vmem:[%s10 + $0x78] sm:$0xff] %vm92, %v1944
  // Predicated region
  $region42: #{tpu_custom_call.1} parent=0 // pred_check
    _
  $region43: #{tpu_custom_call.1} parent=0 // pred_check_branch
    %1962 = sbr.rel (0) target = $region45
  $region44: #{tpu_custom_call.1} parent=0 // pred_region
    _
  $region45: #{tpu_custom_call.1} parent=0 // pred_fallthru
    _
  // Predicated region
  $region46: #{tpu_custom_call.1} parent=0 // pred_check
    _
  $region47: #{tpu_custom_call.1} parent=0 // pred_check_branch
    %1964 = sbr.rel (0) target = $region49
  $region48: #{tpu_custom_call.1} parent=0 // pred_region
    _
  $region49: #{tpu_custom_call.1} parent=0 // pred_fallthru
    _

</llo_original>
